<compile_context>
chip_gen: v7x
topology: tpu7x:2x2x1
jax: 0.10.0
libtpu: 0.0.40
codegen_flags: <defaults>
</compile_context>

<pallas_src>
import jax
import jax.numpy as jnp
from jax.experimental import pallas as pl
from jax.experimental.pallas import tpu as pltpu


def _round_up(x, m):
    return ((x + m - 1) // m) * m


# ----------------------------- Pallas kernel -------------------------------
def _grouped_ffn_kernel(gid_ref, valid_ref, x_ref, g_ref,
                        w1_ref, b1_ref, w2_ref, b2_ref, y_ref):
    # gid_ref is consumed by the weight BlockSpec index_maps only.
    # valid_ref[t] == 0 marks a fully-padded trailing tile -> skip the matmuls.
    t = pl.program_id(0)
    valid = valid_ref[t]

    @pl.when(valid > 0)
    def _compute():
        x = x_ref[...]          # (TN, Dp)  bf16
        g = g_ref[...]          # (TN, 1)   f32  (0 for padded rows)
        w1 = w1_ref[0]          # (Dp, Hp)  bf16
        b1 = b1_ref[0]          # (1, Hp)   f32
        w2 = w2_ref[0]          # (Hp, Dp)  bf16
        b2 = b2_ref[0]          # (1, Dp)   f32

        h = jnp.dot(x, w1, preferred_element_type=jnp.float32) + b1
        h = jnp.maximum(h, 0.0)                                   # ReLU in f32 (VPU)
        out = jnp.dot(h.astype(w2.dtype), w2,
                      preferred_element_type=jnp.float32) + b2
        # Gate applied in f32, stored bf16.  Padded rows have g == 0, so the
        # relu(b1)@W2+b2 "garbage" they would otherwise carry becomes exact 0.
        y_ref[...] = (g * out).astype(y_ref.dtype)

    @pl.when(valid == 0)
    def _skip():
        y_ref[...] = jnp.zeros_like(y_ref)


# --------------------------- sizing helpers ---------------------------------
def _tpu_vmem_budget_bytes():
    try:
        cap = int(pltpu.get_tpu_info().vmem_capacity_bytes)
    except Exception:
        cap = 64 * 1024 * 1024            # conservative fallback (v7x-sized VMEM)
    # ~82% of physical VMEM: ~105 MiB on v5e/v6e (128 MiB), ~52 MiB on v7x (64 MiB).
    return max(int(cap * 0.82), 32 * 1024 * 1024)


def _per_step_vmem_bytes(tn, dp, hp):
    token_io = 2 * (tn * dp * 2) + 2 * (tn * 4)                   # x bf16 + gates f32 (x2 bufs)
    weights = 2 * (dp * hp * 2 + hp * 4 + hp * dp * 2 + dp * 4)    # W1/b1/W2/b2 (x2 bufs)
    out_io = 2 * (tn * dp * 2)                                     # y bf16 (x2 bufs)
    interm = tn * hp * (4 + 2)                                     # h f32 + bf16 copy
    return token_io + weights + out_io + interm


def _pick_token_tile(m_rows, dp, hp, vmem_budget):
    # Floor of 256 rows: keeps the 256x256 MXU (v6e/v7x) occupied and avoids
    # paying the ~0.35us/step pipeline overhead on many tiny tiles (also fine
    # on v5e's 4x128 MXU).  Prefer 512 when the VMEM budget allows.
    cap = max(256, min(512, _round_up(max(m_rows, 1), 256)))
    for tn in (512, 256):
        if tn <= cap and _per_step_vmem_bytes(tn, dp, hp) <= vmem_budget:
            return tn
    # TODO(synk): add a K-tiling grid axis over Hp (accumulate 2nd matmul into a
    # VMEM scratch) when double-buffered W1+W2 + the h intermediate alone
    # approach the budget (large D/H on v7x's 64 MiB VMEM).
    return 256


def prepare_expert_params(w1, b1, w2, b2):
    """One-time layout prep (hoisted out of the forward): pad D/H to 128-lane
    multiples and cast expert weights to bf16; biases stay f32."""
    E, D, H = w1.shape
    Dp, Hp = _round_up(D, 128), _round_up(H, 128)
    return {
        "w1": jnp.pad(w1, ((0, 0), (0, Dp - D), (0, Hp - H))).astype(jnp.bfloat16),
        "b1": jnp.pad(b1, ((0, 0), (0, Hp - H))).astype(jnp.float32).reshape(E, 1, Hp),
        "w2": jnp.pad(w2, ((0, 0), (0, Hp - H), (0, Dp - D))).astype(jnp.bfloat16),
        "b2": jnp.pad(b2, ((0, 0), (0, Dp - D))).astype(jnp.float32).reshape(E, 1, Dp),
        "E": E, "D": D, "H": H, "Dp": Dp, "Hp": Hp,
    }


# ----------------------------- grouped expert FFN ---------------------------
def moe_expert_ffn_grouped(x2d, top_k_gates, top_k_indices, ep):
    """x2d: (N, D) f32, top_k_gates/indices: (N, k), ep: prepare_expert_params().
    Returns (N, D) in x2d.dtype."""
    N, D = x2d.shape
    E, Dp, Hp = ep["E"], ep["Dp"], ep["Hp"]
    k = top_k_indices.shape[-1]
    M = N * k

    vmem_budget = _tpu_vmem_budget_bytes()
    tn = _pick_token_tile(M, Dp, Hp, vmem_budget)
    num_tiles = (M + tn - 1) // tn + E          # static worst case of sum_e ceil(size_e/tn)
    Np = num_tiles * tn

    experts_flat = top_k_indices.reshape(-1).astype(jnp.int32)      # (M,)
    gates_flat = top_k_gates.reshape(-1).astype(jnp.float32)        # (M,)
    token_id = jnp.arange(M, dtype=jnp.int32) // k                  # source token of slot j

    # Counting sort over experts (E is small) instead of a general argsort.
    onehot = (experts_flat[:, None] ==
              jnp.arange(E, dtype=jnp.int32)[None, :]).astype(jnp.int32)      # (M, E)
    expert_size = onehot.sum(axis=0)                                           # (E,)
    rank_in_expert = jnp.take_along_axis(jnp.cumsum(onehot, axis=0) - 1,
                                         experts_flat[:, None], axis=1)[:, 0]  # (M,)

    group_tiles = (expert_size + tn - 1) // tn
    tile_start = jnp.concatenate([jnp.zeros((1,), jnp.int32),
                                  jnp.cumsum(group_tiles)[:-1].astype(jnp.int32)])
    total_used_tiles = jnp.sum(group_tiles).astype(jnp.int32)
    pad_offset = tile_start * tn                                    # row start of group e
    dest = pad_offset[experts_flat] + rank_in_expert                # (M,) rows in padded buf

    # Per-tile expert id and valid-row count (scalar-prefetched into SMEM).
    t_idx = jnp.arange(num_tiles, dtype=jnp.int32)
    tile_gid = jnp.clip(
        jnp.sum((tile_start[None, :] <= t_idx[:, None]).astype(jnp.int32), axis=1) - 1,
        0, E - 1).astype(jnp.int32)
    local_tile = t_idx - tile_start[tile_gid]
    tile_valid = jnp.where(t_idx < total_used_tiles,
                           jnp.clip(expert_size[tile_gid] - local_tile * tn, 0, tn),
                           0).astype(jnp.int32)

    # Gather tokens directly into expert-sorted padded order (no zero-init +
    # D-wide scatter pass).  Padded rows point at token 0; harmless because
    # their gate is 0, so the kernel stores exact zeros for them.
    src_row = jnp.zeros((Np,), jnp.int32).at[dest].set(token_id)
    x2d_p = jnp.pad(x2d, ((0, 0), (0, Dp - D))).astype(jnp.bfloat16)
    x_pad = x2d_p[src_row]                                                     # (Np, Dp) bf16
    g_pad = jnp.zeros((Np,), jnp.float32).at[dest].set(gates_flat).reshape(Np, 1)

    flops = 4 * Np * Dp * Hp                    # two matmuls, 2*TN*D*H each
    bytes_accessed = (Np * Dp * 2 + Np * 4 + Np * Dp * 2
                      + E * (2 * Dp * Hp * 2 + (Hp + Dp) * 4))

    y_pad = pl.pallas_call(
        _grouped_ffn_kernel,
        out_shape=jax.ShapeDtypeStruct((Np, Dp), jnp.bfloat16),
        grid_spec=pltpu.PrefetchScalarGridSpec(
            num_scalar_prefetch=2,              # tile_gid, tile_valid -> SMEM
            grid=(num_tiles,),
            in_specs=[
                pl.BlockSpec((tn, Dp), lambda t, gid, val: (t, 0)),            # tokens
                pl.BlockSpec((tn, 1), lambda t, gid, val: (t, 0)),             # gates
                # Expert weights: block index is constant within an expert's run
                # of tiles, so Pallas's same-block-index revisit skips re-DMA.
                pl.BlockSpec((1, Dp, Hp), lambda t, gid, val: (gid[t], 0, 0)),  # W1[e]
                pl.BlockSpec((1, 1, Hp), lambda t, gid, val: (gid[t], 0, 0)),   # b1[e]
                pl.BlockSpec((1, Hp, Dp), lambda t, gid, val: (gid[t], 0, 0)),  # W2[e]
                pl.BlockSpec((1, 1, Dp), lambda t, gid, val: (gid[t], 0, 0)),   # b2[e]
            ],
            out_specs=pl.BlockSpec((tn, Dp), lambda t, gid, val: (t, 0)),
        ),
        compiler_params=pltpu.CompilerParams(
            dimension_semantics=("parallel",),   # independent row tiles -> megacore
            vmem_limit_bytes=vmem_budget,
        ),
        cost_estimate=pl.CostEstimate(flops=flops, transcendentals=0,
                                      bytes_accessed=bytes_accessed),
    )(tile_gid, tile_valid, x_pad, g_pad, ep["w1"], ep["b1"], ep["w2"], ep["b2"])

    # Gate already applied in-kernel; scatter-add back to token order
    # (matches torch index_add over batch_index) and drop lane padding.
    contrib = y_pad[dest][:, :D].astype(jnp.float32)                           # (M, D)
    y = jnp.zeros((N, D), jnp.float32).at[token_id].add(contrib)
    return y.astype(x2d.dtype)


# ----------------------------- gating (glue) --------------------------------
def top_k_gating(x2d, wg, k, num_experts, noise_key, noise_epsilon=0.01):
    # f_gate = Linear(D, 2E, bias=False), zero-initialized weight (as in module).
    clean = x2d @ wg.T                                    # (N, 2E)
    clean_logits, raw_noise_stddev = jnp.split(clean, 2, axis=-1)
    noise_stddev = jax.nn.softplus(raw_noise_stddev) + noise_epsilon
    eps = jax.random.normal(noise_key, clean_logits.shape, clean_logits.dtype)
    logits = clean_logits + eps * noise_stddev            # noisy_gating=True
    probs = jax.nn.softmax(logits, axis=1)
    top_k_gates, top_k_idx = jax.lax.top_k(probs, k)
    N = x2d.shape[0]
    gates = jnp.zeros((N, num_experts), probs.dtype).at[
        jnp.arange(N)[:, None], top_k_idx].set(top_k_gates)
    return gates, probs, logits, top_k_gates, top_k_idx


def _cv_squared(x):
    eps = 1e-10
    if x.shape[0] == 1:
        return jnp.float32(0.0)
    return jnp.var(x, ddof=1) / (jnp.mean(x) ** 2 + eps)


def _l1_normalize(x):
    return x / jnp.maximum(jnp.sum(jnp.abs(x)), 1e-12)


def moe_forward(x, wg, expert_params, k, num_experts, noise_key,
                cvloss=0.0, switchloss=0.0, zloss=0.0):
    bsz, length, emb = x.shape
    x2d = x.reshape(-1, emb)
    gates, probs, logits, top_k_gates, top_k_idx = top_k_gating(
        x2d, wg, k, num_experts, noise_key)

    expert_size = (gates > 0).sum(axis=0)
    # Aux losses (coefficients default to 0, matching the module defaults).
    loss = (cvloss * _cv_squared(_l1_normalize(gates.sum(0)))
            + switchloss * jnp.sum(_l1_normalize(probs.sum(0))
                                   * _l1_normalize(expert_size.astype(jnp.float32)))
            * num_experts
            + zloss * jnp.mean(jnp.log(jnp.exp(logits).sum(axis=1)) ** 2))

    y2d = moe_expert_ffn_grouped(x2d, top_k_gates, top_k_idx, expert_params)
    return y2d.reshape(bsz, length, emb), loss


# --------------------------------- main --------------------------------------
if __name__ == "__main__":
    bsz, length = 2, 8
    input_size, head_size = 32, 64      # D, H  (padded in-wrapper to 128 lanes)
    num_experts, k = 8, 2               # E, k

    key = jax.random.PRNGKey(0)
    kx, kw1, kb1, kw2, kb2, knoise = jax.random.split(key, 6)

    x = jax.random.normal(kx, (bsz, length, input_size), jnp.float32)

    # Deterministic parameter init (shapes / ranges match ParallelExperts / f_gate).
    w1 = jax.random.uniform(kw1, (num_experts, input_size, head_size), jnp.float32,
                            -1.0 / input_size, 1.0 / input_size)
    b1 = jax.random.uniform(kb1, (num_experts, head_size), jnp.float32,
                            -1.0 / (input_size ** 0.5), 1.0 / (input_size ** 0.5))
    w2 = jax.random.uniform(kw2, (num_experts, head_size, input_size), jnp.float32,
                            -1.0 / head_size, 1.0 / head_size)
    b2 = jax.random.uniform(kb2, (num_experts, input_size), jnp.float32,
                            -1.0 / (head_size ** 0.5), 1.0 / (head_size ** 0.5))
    wg = jnp.zeros((2 * num_experts, input_size), jnp.float32)   # zero-init f_gate

    # One-time weight prep (bf16 cast + lane padding) hoisted out of the forward.
    ep = prepare_expert_params(w1, b1, w2, b2)

    fwd = jax.jit(lambda xx: moe_forward(xx, wg, ep, k, num_experts, knoise))
    y, loss = fwd(x)
    jax.block_until_ready((y, loss))

    # Pure-JAX reference with the same numerics (bf16 MXU inputs, f32 accum,
    # f32 gate multiply, bf16 per-contribution cast, f32 combine), expressed
    # densely over experts — mathematically equal since unselected gates are 0.
    x2d = x.reshape(-1, input_size)
    gates_ref, _, _, _, _ = top_k_gating(x2d, wg, k, num_experts, knoise)
    xb = x2d.astype(jnp.bfloat16)
    w1b = w1.astype(jnp.bfloat16)
    w2b = w2.astype(jnp.bfloat16)
    h_ref = jnp.einsum("nd,edh->enh", xb, w1b,
                       preferred_element_type=jnp.float32) + b1[:, None, :]
    h_ref = jnp.maximum(h_ref, 0.0)
    o_ref = jnp.einsum("enh,ehd->end", h_ref.astype(jnp.bfloat16), w2b,
                       preferred_element_type=jnp.float32) + b2[:, None, :]
    contrib_ref = (gates_ref.T[:, :, None].astype(jnp.float32) * o_ref).astype(jnp.bfloat16)
    y_ref = jnp.sum(contrib_ref.astype(jnp.float32), axis=0).reshape(
        bsz, length, input_size)

    assert jnp.allclose(y, y_ref, atol=2e-3, rtol=2e-3), (
        float(jnp.max(jnp.abs(y - y_ref))))
    assert bool(jnp.isfinite(loss))
    print("KERNEL_OK")
</pallas_src>

<mosaic_0001>
module attributes {stable_mosaic.version = 11 : i64} {
  func.func @_grouped_ffn_kernel(%arg0: i32, %arg1: memref<9xi32, #tpu.memory_space<smem>>, %arg2: memref<9xi32, #tpu.memory_space<smem>>, %arg3: memref<256x128xbf16, #tpu.memory_space<vmem>>, %arg4: memref<256x1xf32, #tpu.memory_space<vmem>>, %arg5: memref<1x128x128xbf16, #tpu.memory_space<vmem>>, %arg6: memref<1x1x128xf32, #tpu.memory_space<vmem>>, %arg7: memref<1x128x128xbf16, #tpu.memory_space<vmem>>, %arg8: memref<1x1x128xf32, #tpu.memory_space<vmem>>, %arg9: memref<256x128xbf16, #tpu.memory_space<vmem>>) attributes {dimension_semantics = [#tpu.dimension_semantics<parallel>], iteration_bounds = array<i64: 9>, scalar_prefetch = 2 : i64, scratch_operands = 0 : i64, tpu.core_type = #tpu.core_type<tc>, window_params = [{transform_indices = @transform_0, window_bounds = array<i64: 256, 128>}, {transform_indices = @transform_1, window_bounds = array<i64: 256, 1>}, {transform_indices = @transform_2, window_bounds = array<i64: 1, 128, 128>}, {transform_indices = @transform_3, window_bounds = array<i64: 1, 1, 128>}, {transform_indices = @transform_4, window_bounds = array<i64: 1, 128, 128>}, {transform_indices = @transform_5, window_bounds = array<i64: 1, 1, 128>}, {transform_indices = @transform_6, window_bounds = array<i64: 256, 128>}]} {
    %0 = arith.index_cast %arg0 : i32 to index
    %1 = memref.load %arg2[%0] : memref<9xi32, #tpu.memory_space<smem>>
    %c0_i32 = arith.constant 0 : i32
    %2 = arith.cmpi sgt, %1, %c0_i32 : i32
    %3 = arith.extui %2 : i1 to i32
    %c0_i32_0 = arith.constant 0 : i32
    %4 = arith.cmpi ne, %3, %c0_i32_0 : i32
    scf.if %4 {
      %c0 = arith.constant 0 : index
      %c0_3 = arith.constant 0 : index
      %8 = vector.load %arg3[%c0, %c0_3] : memref<256x128xbf16, #tpu.memory_space<vmem>>, vector<256x128xbf16>
      %c0_4 = arith.constant 0 : index
      %c0_5 = arith.constant 0 : index
      %9 = vector.load %arg4[%c0_4, %c0_5] : memref<256x1xf32, #tpu.memory_space<vmem>>, vector<256x1xf32>
      %c0_6 = arith.constant 0 : index
      %c0_7 = arith.constant 0 : index
      %c0_8 = arith.constant 0 : index
      %10 = vector.load %arg5[%c0_6, %c0_7, %c0_8] : memref<1x128x128xbf16, #tpu.memory_space<vmem>>, vector<1x128x128xbf16>
      %11 = vector.shape_cast %10 : vector<1x128x128xbf16> to vector<128x128xbf16>
      %c0_9 = arith.constant 0 : index
      %c0_10 = arith.constant 0 : index
      %c0_11 = arith.constant 0 : index
      %12 = vector.load %arg6[%c0_9, %c0_10, %c0_11] : memref<1x1x128xf32, #tpu.memory_space<vmem>>, vector<1x1x128xf32>
      %13 = vector.shape_cast %12 : vector<1x1x128xf32> to vector<1x128xf32>
      %c0_12 = arith.constant 0 : index
      %c0_13 = arith.constant 0 : index
      %c0_14 = arith.constant 0 : index
      %14 = vector.load %arg7[%c0_12, %c0_13, %c0_14] : memref<1x128x128xbf16, #tpu.memory_space<vmem>>, vector<1x128x128xbf16>
      %15 = vector.shape_cast %14 : vector<1x128x128xbf16> to vector<128x128xbf16>
      %c0_15 = arith.constant 0 : index
      %c0_16 = arith.constant 0 : index
      %c0_17 = arith.constant 0 : index
      %16 = vector.load %arg8[%c0_15, %c0_16, %c0_17] : memref<1x1x128xf32, #tpu.memory_space<vmem>>, vector<1x1x128xf32>
      %17 = vector.shape_cast %16 : vector<1x1x128xf32> to vector<1x128xf32>
      %cst = arith.constant dense<0.000000e+00> : vector<256x128xf32>
      %18 = tpu.matmul %8, %11, %cst {dimension_numbers = #tpu.dot_dimension_numbers<[1], [0], [0], [1], [0, 0, 1, 1], [], []>} : vector<256x128xbf16>, vector<128x128xbf16>, vector<256x128xf32> -> vector<256x128xf32>
      %19 = vector.broadcast %13 : vector<1x128xf32> to vector<256x128xf32>
      %20 = arith.addf %18, %19 : vector<256x128xf32>
      %cst_18 = arith.constant 0.000000e+00 : f32
      %21 = vector.broadcast %cst_18 : f32 to vector<256x128xf32>
      %22 = arith.maximumf %20, %21 : vector<256x128xf32>
      %23 = arith.truncf %22 : vector<256x128xf32> to vector<256x128xbf16>
      %cst_19 = arith.constant dense<0.000000e+00> : vector<256x128xf32>
      %24 = tpu.matmul %23, %15, %cst_19 {dimension_numbers = #tpu.dot_dimension_numbers<[1], [0], [0], [1], [0, 0, 1, 1], [], []>} : vector<256x128xbf16>, vector<128x128xbf16>, vector<256x128xf32> -> vector<256x128xf32>
      %25 = vector.broadcast %17 : vector<1x128xf32> to vector<256x128xf32>
      %26 = arith.addf %24, %25 : vector<256x128xf32>
      %27 = vector.broadcast %9 : vector<256x1xf32> to vector<256x128xf32>
      %28 = arith.mulf %27, %26 : vector<256x128xf32>
      %29 = arith.truncf %28 : vector<256x128xf32> to vector<256x128xbf16>
      %c0_20 = arith.constant 0 : index
      %c0_21 = arith.constant 0 : index
      %30 = vector.load %arg9[%c0_20, %c0_21] : memref<256x128xbf16, #tpu.memory_space<vmem>>, vector<256x128xbf16>
      tpu.vector_store %arg9[%c0_20, %c0_21], %29 {strides = array<i32>} : memref<256x128xbf16, #tpu.memory_space<vmem>>, vector<256x128xbf16>,
    } else {
    }
    %c0_i32_1 = arith.constant 0 : i32
    %5 = arith.cmpi eq, %1, %c0_i32_1 : i32
    %6 = arith.extui %5 : i1 to i32
    %c0_i32_2 = arith.constant 0 : i32
    %7 = arith.cmpi ne, %6, %c0_i32_2 : i32
    scf.if %7 {
      %cst = arith.constant 0.000000e+00 : bf16
      %8 = vector.broadcast %cst : bf16 to vector<256x128xbf16>
      %c0 = arith.constant 0 : index
      %c0_3 = arith.constant 0 : index
      %9 = vector.load %arg9[%c0, %c0_3] : memref<256x128xbf16, #tpu.memory_space<vmem>>, vector<256x128xbf16>
      tpu.vector_store %arg9[%c0, %c0_3], %8 {strides = array<i32>} : memref<256x128xbf16, #tpu.memory_space<vmem>>, vector<256x128xbf16>,
    } else {
    }
    return
  }
  func.func @transform_0(%arg0: i32, %arg1: memref<9xi32, #tpu.memory_space<smem>>, %arg2: memref<9xi32, #tpu.memory_space<smem>>) -> (i32, i32) {
    %c0_i32 = arith.constant 0 : i32
    %c0_i32_0 = arith.constant 0 : i32
    return %arg0, %c0_i32 : i32, i32
  }
  func.func @transform_1(%arg0: i32, %arg1: memref<9xi32, #tpu.memory_space<smem>>, %arg2: memref<9xi32, #tpu.memory_space<smem>>) -> (i32, i32) {
    %c0_i32 = arith.constant 0 : i32
    %c0_i32_0 = arith.constant 0 : i32
    return %arg0, %c0_i32 : i32, i32
  }
  func.func @transform_2(%arg0: i32, %arg1: memref<9xi32, #tpu.memory_space<smem>>, %arg2: memref<9xi32, #tpu.memory_space<smem>>) -> (i32, i32, i32) {
    %0 = arith.index_cast %arg0 : i32 to index
    %1 = memref.load %arg1[%0] : memref<9xi32, #tpu.memory_space<smem>>
    %c0_i32 = arith.constant 0 : i32
    %c0_i32_0 = arith.constant 0 : i32
    %c0_i32_1 = arith.constant 0 : i32
    return %1, %c0_i32, %c0_i32_0 : i32, i32, i32
  }
  func.func @transform_3(%arg0: i32, %arg1: memref<9xi32, #tpu.memory_space<smem>>, %arg2: memref<9xi32, #tpu.memory_space<smem>>) -> (i32, i32, i32) {
    %0 = arith.index_cast %arg0 : i32 to index
    %1 = memref.load %arg1[%0] : memref<9xi32, #tpu.memory_space<smem>>
    %c0_i32 = arith.constant 0 : i32
    %c0_i32_0 = arith.constant 0 : i32
    %c0_i32_1 = arith.constant 0 : i32
    return %1, %c0_i32, %c0_i32_0 : i32, i32, i32
  }
  func.func @transform_4(%arg0: i32, %arg1: memref<9xi32, #tpu.memory_space<smem>>, %arg2: memref<9xi32, #tpu.memory_space<smem>>) -> (i32, i32, i32) {
    %0 = arith.index_cast %arg0 : i32 to index
    %1 = memref.load %arg1[%0] : memref<9xi32, #tpu.memory_space<smem>>
    %c0_i32 = arith.constant 0 : i32
    %c0_i32_0 = arith.constant 0 : i32
    %c0_i32_1 = arith.constant 0 : i32
    return %1, %c0_i32, %c0_i32_0 : i32, i32, i32
  }
  func.func @transform_5(%arg0: i32, %arg1: memref<9xi32, #tpu.memory_space<smem>>, %arg2: memref<9xi32, #tpu.memory_space<smem>>) -> (i32, i32, i32) {
    %0 = arith.index_cast %arg0 : i32 to index
    %1 = memref.load %arg1[%0] : memref<9xi32, #tpu.memory_space<smem>>
    %c0_i32 = arith.constant 0 : i32
    %c0_i32_0 = arith.constant 0 : i32
    %c0_i32_1 = arith.constant 0 : i32
    return %1, %c0_i32, %c0_i32_0 : i32, i32, i32
  }
  func.func @transform_6(%arg0: i32, %arg1: memref<9xi32, #tpu.memory_space<smem>>, %arg2: memref<9xi32, #tpu.memory_space<smem>>) -> (i32, i32) {
    %c0_i32 = arith.constant 0 : i32
    %c0_i32_0 = arith.constant 0 : i32
    return %arg0, %c0_i32 : i32, i32
  }
}

</mosaic_0001>

<llo_original>
// kernel: eq.8
$region0: #{eq.8}
  %s0 = inlined_call_operand.vmem [shape: s32[16,2], index: 0, kind: input, shape index: {}]
  %s1 = inlined_call_operand.vmem [shape: s32[32], index: 1, kind: output, shape index: {}]
  $region1: #{eq.8} parent=0
    #allocation0 [shape = 'u8[4096]{0}', space=vmem, size = 0x1000, scoped, tag = 'scoped mem for output reshape']
    %v2 = vld [vmem:[%s0] sm:$0x1]
    %vm3 = vcmask 15360
    %4 = vst.msk [vmem:[#allocation0] sm:$0x1] %vm3, %v2
    %s5 = scalar_lea.vmem %s0, 15
    %v6 = vld [vmem:[%s5] sm:$0x1]
    %7 = vrot.lane.b32.xlu0 %v6, 30
    %v8 = vpop.permute.xlu0 %7
    %vm9 = vcmask 261360
    %10 = vst.msk [vmem:[#allocation0] sm:$0x1] %vm9, %v8
    %s11 = scalar_lea.vmem %s0, 14
    %v12 = vld [vmem:[%s11] sm:$0x1]
    %13 = vrot.lane.b32.xlu0 %v12, 28
    %v14 = vpop.permute.xlu0 %13
    %vm15 = vcmask 244960
    %16 = vst.msk [vmem:[#allocation0] sm:$0x1] %vm15, %v14
    %s17 = scalar_lea.vmem %s0, 13
    %v18 = vld [vmem:[%s17] sm:$0x1]
    %19 = vrot.lane.b32.xlu0 %v18, 26
    %v20 = vpop.permute.xlu0 %19
    %vm21 = vcmask 228560
    %22 = vst.msk [vmem:[#allocation0] sm:$0x1] %vm21, %v20
    %s23 = scalar_lea.vmem %s0, 12
    %v24 = vld [vmem:[%s23] sm:$0x1]
    %25 = vrot.lane.b32.xlu0 %v24, 24
    %v26 = vpop.permute.xlu0 %25
    %vm27 = vcmask 212160
    %28 = vst.msk [vmem:[#allocation0] sm:$0x1] %vm27, %v26
    %s29 = scalar_lea.vmem %s0, 11
    %v30 = vld [vmem:[%s29] sm:$0x1]
    %31 = vrot.lane.b32.xlu0 %v30, 22
    %v32 = vpop.permute.xlu0 %31
    %vm33 = vcmask 195760
    %34 = vst.msk [vmem:[#allocation0] sm:$0x1] %vm33, %v32
    %s35 = scalar_lea.vmem %s0, 10
    %v36 = vld [vmem:[%s35] sm:$0x1]
    %37 = vrot.lane.b32.xlu0 %v36, 20
    %v38 = vpop.permute.xlu0 %37
    %vm39 = vcmask 179360
    %40 = vst.msk [vmem:[#allocation0] sm:$0x1] %vm39, %v38
    %s41 = scalar_lea.vmem %s0, 9
    %v42 = vld [vmem:[%s41] sm:$0x1]
    %43 = vrot.lane.b32.xlu0 %v42, 18
    %v44 = vpop.permute.xlu0 %43
    %vm45 = vcmask 162960
    %46 = vst.msk [vmem:[#allocation0] sm:$0x1] %vm45, %v44
    %s47 = scalar_lea.vmem %s0, 8
    %v48 = vld [vmem:[%s47] sm:$0x1]
    %49 = vrot.lane.b32.xlu0 %v48, 16
    %v50 = vpop.permute.xlu0 %49
    %vm51 = vcmask 146560
    %52 = vst.msk [vmem:[#allocation0] sm:$0x1] %vm51, %v50
    %s53 = scalar_lea.vmem %s0, 7
    %v54 = vld [vmem:[%s53] sm:$0x1]
    %55 = vrot.lane.b32.xlu0 %v54, 14
    %v56 = vpop.permute.xlu0 %55
    %vm57 = vcmask 130160
    %58 = vst.msk [vmem:[#allocation0] sm:$0x1] %vm57, %v56
    %s59 = scalar_lea.vmem %s0, 6
    %v60 = vld [vmem:[%s59] sm:$0x1]
    %61 = vrot.lane.b32.xlu0 %v60, 12
    %v62 = vpop.permute.xlu0 %61
    %vm63 = vcmask 113760
    %64 = vst.msk [vmem:[#allocation0] sm:$0x1] %vm63, %v62
    %s65 = scalar_lea.vmem %s0, 5
    %v66 = vld [vmem:[%s65] sm:$0x1]
    %67 = vrot.lane.b32.xlu0 %v66, 10
    %v68 = vpop.permute.xlu0 %67
    %vm69 = vcmask 97360
    %70 = vst.msk [vmem:[#allocation0] sm:$0x1] %vm69, %v68
    %s71 = scalar_lea.vmem %s0, 4
    %v72 = vld [vmem:[%s71] sm:$0x1]
    %73 = vrot.lane.b32.xlu0 %v72, 8
    %v74 = vpop.permute.xlu0 %73
    %vm75 = vcmask 80960
    %76 = vst.msk [vmem:[#allocation0] sm:$0x1] %vm75, %v74
    %s77 = scalar_lea.vmem %s0, 3
    %v78 = vld [vmem:[%s77] sm:$0x1]
    %79 = vrot.lane.b32.xlu0 %v78, 6
    %v80 = vpop.permute.xlu0 %79
    %vm81 = vcmask 64560
    %82 = vst.msk [vmem:[#allocation0] sm:$0x1] %vm81, %v80
    %s83 = scalar_lea.vmem %s0, 2
    %v84 = vld [vmem:[%s83] sm:$0x1]
    %85 = vrot.lane.b32.xlu0 %v84, 4
    %v86 = vpop.permute.xlu0 %85
    %vm87 = vcmask 48160
    %88 = vst.msk [vmem:[#allocation0] sm:$0x1] %vm87, %v86
    %s89 = scalar_lea.vmem %s0, 1
    %v90 = vld [vmem:[%s89] sm:$0x1]
    %91 = vrot.lane.b32.xlu0 %v90, 2
    %v92 = vpop.permute.xlu0 %91
    %vm93 = vcmask 31760
    %94 = vst.msk [vmem:[#allocation0] sm:$0x1] %vm93, %v92
    %s96 = sshllo.u32 0, 1
    %v98 = vld [vmem:[#allocation0] sm:%s96]
    %s99 = sshllo.u32 0, 1
    %100 = vst [vmem:[%s1] sm:%s99] %v98

// kernel: _lambda_.1
$region0: #{_lambda_.1}
  #allocation0 [shape = 'u32[]', space=smem, size = 0x4, offset = 0x4, fixed_abs, tag = 'smem constant byte address 0x4 - core index']
  #allocation1 [shape = 'u32[144,128]{1,0:T(1,128)}', space=vmem, size = 0x12000, scoped, tag = 'internal scratch']
  #allocation2 [shape = 's32[1]{0}', space=sflag, size = 0x4, scoped, tag = 'scoped memory for _lambda_.1']
  #allocation3 [shape = 'u8[512]{0}', space=smem, size = 0x200, scoped, tag = 'prefetched SMEM operand 0']
  #allocation4 [shape = 'u8[512]{0}', space=smem, size = 0x200, scoped, tag = 'prefetched SMEM operand 1']
  %s0 = inlined_call_operand.vmem [shape: s32[9], index: 0, kind: input, shape index: {}]
  %s1 = inlined_call_operand.vmem [shape: s32[9], index: 1, kind: input, shape index: {}]
  %s2 = inlined_call_operand.vmem [shape: bf16[2304,128], index: 2, kind: input, shape index: {}]
  %s3 = inlined_call_operand.vmem [shape: f32[2304,1], index: 3, kind: input, shape index: {}]
  %s4 = inlined_call_operand.vmem [shape: bf16[8,128,128], index: 4, kind: input, shape index: {}]
  %s5 = inlined_call_operand.vmem [shape: f32[8,1,128], index: 5, kind: input, shape index: {}]
  %s6 = inlined_call_operand.vmem [shape: bf16[8,128,128], index: 6, kind: input, shape index: {}]
  %s7 = inlined_call_operand.vmem [shape: f32[8,1,128], index: 7, kind: input, shape index: {}]
  %s8 = inlined_call_operand.vmem [shape: bf16[2304,128], index: 8, kind: output, shape index: {}]
  %s9 = sld [smem:[#allocation0]]
  $region65: #{_lambda_.1} parent=0
    _
  %s11 = ssub.s32 1, %s9
  %s12 = scalar_select 0, %s11, %s9
  %s13 = sshll.u32 %s0, 4
  %s14 = int_to_ptr.vmem [resolvable:$true] %s13
  %16 = dma.vmem_to_smem %s14, 16, [#allocation3], [#allocation2]
  %s17 = sshll.u32 %s1, 4
  %s18 = int_to_ptr.vmem [resolvable:$true] %s17
  %20 = dma.vmem_to_smem %s18, 16, [#allocation4], [#allocation2]
  %21 = dma.done [#allocation2], 32
  %22 = sfence
  loop: start=0, step=1, limit=11
  $region2: #{_lambda_.1} parent=0 // loop_pre_header
    _
  $region3: #{_lambda_.1} parent=0 // loop_header
    %s24 = sphi 0, %s28
    %p25 = scmp.ge.s32.totalorder %s24, 11
    %s34 = sphi 0, %s36
    %s37 = sphi 0, %s34
    %s38 = sphi 0, %s37
    %s54 = sphi 0, %s38
    %s60 = sphi 0, %s62
    %s63 = sphi 0, %s60
    %s64 = sphi 0, %s63
    %s80 = sphi 0, %s64
    %s88 = sphi 0, %s90
    %s91 = sphi 0, %s88
    %s92 = sphi 0, %s91
    %s108 = sphi 0, %s92
    %s116 = sphi 0, %s118
    %s119 = sphi 0, %s116
    %s120 = sphi 0, %s119
    %s136 = sphi 0, %s120
    %s144 = sphi 0, %s146
    %s147 = sphi 0, %s144
    %s148 = sphi 0, %s147
    %s164 = sphi 0, %s148
    %s172 = sphi 0, %s174
    %s175 = sphi 0, %s172
    %s176 = sphi 0, %s175
    %s192 = sphi 0, %s176
    %s198 = sphi 0, %s200
    %s201 = sphi 0, %s198
    %s202 = sphi 0, %s201
    %s218 = sphi 0, %s202
  $region4: #{_lambda_.1} parent=0 // loop_header_branch
    %27 = sbr.rel (%p25) target = $region8
  $region5: #{_lambda_.1} parent=0 // loop_body
    %s29 = ssub.s32 %s24, 1
    %s30 = ssub.s32 %s24, 2
    %s31 = sadd.s32 %s24, 1
    %s32 = ssub.s32 %s24, %s31
    %p33 = scmp.eq.s32.totalorder %s32, 0
    %s35 = sadd.s32 %s34, 1
    %s36 = scalar_select %p33, %s34, %s35
    %p39 = pneg %p33
    %p40 = scmp.eq.s32.totalorder %s24, 8
    %p41 = por %p39, %p40
    %p42 = scmp.ne.s32.totalorder %s34, %s37
    %p43 = scmp.eq.s32.totalorder %s24, 0
    %p44 = por %p42, %p43
    %p45 = scmp.ne.s32.totalorder %s34, %s37
    %p46 = scmp.eq.s32.totalorder %s29, 8
    %p47 = por %p45, %p46
    %p48 = scmp.ne.s32.totalorder %s37, %s38
    %p49 = scmp.eq.s32.totalorder %s29, 0
    %p50 = por %p48, %p49
    %p51 = scmp.ne.s32.totalorder %s37, %s38
    %p52 = scmp.eq.s32.totalorder %s30, 8
    %p53 = por %p51, %p52
    %p55 = scmp.ne.s32.totalorder %s38, %s54
    %p56 = scmp.eq.s32.totalorder %s30, 0
    %p57 = por %p55, %p56
    %s58 = ssub.s32 %s24, %s31
    %p59 = scmp.eq.s32.totalorder %s58, 0
    %s61 = sadd.s32 %s60, 1
    %s62 = scalar_select %p59, %s60, %s61
    %p65 = pneg %p59
    %p66 = scmp.eq.s32.totalorder %s24, 8
    %p67 = por %p65, %p66
    %p68 = scmp.ne.s32.totalorder %s60, %s63
    %p69 = scmp.eq.s32.totalorder %s24, 0
    %p70 = por %p68, %p69
    %p71 = scmp.ne.s32.totalorder %s60, %s63
    %p72 = scmp.eq.s32.totalorder %s29, 8
    %p73 = por %p71, %p72
    %p74 = scmp.ne.s32.totalorder %s63, %s64
    %p75 = scmp.eq.s32.totalorder %s29, 0
    %p76 = por %p74, %p75
    %p77 = scmp.ne.s32.totalorder %s63, %s64
    %p78 = scmp.eq.s32.totalorder %s30, 8
    %p79 = por %p77, %p78
    %p81 = scmp.ne.s32.totalorder %s64, %s80
    %p82 = scmp.eq.s32.totalorder %s30, 0
    %p83 = por %p81, %p82
    %s84 = sld [smem:[#allocation3 + %s24]]
    %s85 = sld [smem:[#allocation3 + %s31]]
    %s86 = ssub.s32 %s84, %s85
    %p87 = scmp.eq.s32.totalorder %s86, 0
    %s89 = sadd.s32 %s88, 1
    %s90 = scalar_select %p87, %s88, %s89
    %p93 = pneg %p87
    %p94 = scmp.eq.s32.totalorder %s24, 8
    %p95 = por %p93, %p94
    %p96 = scmp.ne.s32.totalorder %s88, %s91
    %p97 = scmp.eq.s32.totalorder %s24, 0
    %p98 = por %p96, %p97
    %p99 = scmp.ne.s32.totalorder %s88, %s91
    %p100 = scmp.eq.s32.totalorder %s29, 8
    %p101 = por %p99, %p100
    %p102 = scmp.ne.s32.totalorder %s91, %s92
    %p103 = scmp.eq.s32.totalorder %s29, 0
    %p104 = por %p102, %p103
    %p105 = scmp.ne.s32.totalorder %s91, %s92
    %p106 = scmp.eq.s32.totalorder %s30, 8
    %p107 = por %p105, %p106
    %p109 = scmp.ne.s32.totalorder %s92, %s108
    %p110 = scmp.eq.s32.totalorder %s30, 0
    %p111 = por %p109, %p110
    %s112 = sld [smem:[#allocation3 + %s24]]
    %s113 = sld [smem:[#allocation3 + %s31]]
    %s114 = ssub.s32 %s112, %s113
    %p115 = scmp.eq.s32.totalorder %s114, 0
    %s117 = sadd.s32 %s116, 1
    %s118 = scalar_select %p115, %s116, %s117
    %p121 = pneg %p115
    %p122 = scmp.eq.s32.totalorder %s24, 8
    %p123 = por %p121, %p122
    %p124 = scmp.ne.s32.totalorder %s116, %s119
    %p125 = scmp.eq.s32.totalorder %s24, 0
    %p126 = por %p124, %p125
    %p127 = scmp.ne.s32.totalorder %s116, %s119
    %p128 = scmp.eq.s32.totalorder %s29, 8
    %p129 = por %p127, %p128
    %p130 = scmp.ne.s32.totalorder %s119, %s120
    %p131 = scmp.eq.s32.totalorder %s29, 0
    %p132 = por %p130, %p131
    %p133 = scmp.ne.s32.totalorder %s119, %s120
    %p134 = scmp.eq.s32.totalorder %s30, 8
    %p135 = por %p133, %p134
    %p137 = scmp.ne.s32.totalorder %s120, %s136
    %p138 = scmp.eq.s32.totalorder %s30, 0
    %p139 = por %p137, %p138
    %s140 = sld [smem:[#allocation3 + %s24]]
    %s141 = sld [smem:[#allocation3 + %s31]]
    %s142 = ssub.s32 %s140, %s141
    %p143 = scmp.eq.s32.totalorder %s142, 0
    %s145 = sadd.s32 %s144, 1
    %s146 = scalar_select %p143, %s144, %s145
    %p149 = pneg %p143
    %p150 = scmp.eq.s32.totalorder %s24, 8
    %p151 = por %p149, %p150
    %p152 = scmp.ne.s32.totalorder %s144, %s147
    %p153 = scmp.eq.s32.totalorder %s24, 0
    %p154 = por %p152, %p153
    %p155 = scmp.ne.s32.totalorder %s144, %s147
    %p156 = scmp.eq.s32.totalorder %s29, 8
    %p157 = por %p155, %p156
    %p158 = scmp.ne.s32.totalorder %s147, %s148
    %p159 = scmp.eq.s32.totalorder %s29, 0
    %p160 = por %p158, %p159
    %p161 = scmp.ne.s32.totalorder %s147, %s148
    %p162 = scmp.eq.s32.totalorder %s30, 8
    %p163 = por %p161, %p162
    %p165 = scmp.ne.s32.totalorder %s148, %s164
    %p166 = scmp.eq.s32.totalorder %s30, 0
    %p167 = por %p165, %p166
    %s168 = sld [smem:[#allocation3 + %s24]]
    %s169 = sld [smem:[#allocation3 + %s31]]
    %s170 = ssub.s32 %s168, %s169
    %p171 = scmp.eq.s32.totalorder %s170, 0
    %s173 = sadd.s32 %s172, 1
    %s174 = scalar_select %p171, %s172, %s173
    %p177 = pneg %p171
    %p178 = scmp.eq.s32.totalorder %s24, 8
    %p179 = por %p177, %p178
    %p180 = scmp.ne.s32.totalorder %s172, %s175
    %p181 = scmp.eq.s32.totalorder %s24, 0
    %p182 = por %p180, %p181
    %p183 = scmp.ne.s32.totalorder %s172, %s175
    %p184 = scmp.eq.s32.totalorder %s29, 8
    %p185 = por %p183, %p184
    %p186 = scmp.ne.s32.totalorder %s175, %s176
    %p187 = scmp.eq.s32.totalorder %s29, 0
    %p188 = por %p186, %p187
    %p189 = scmp.ne.s32.totalorder %s175, %s176
    %p190 = scmp.eq.s32.totalorder %s30, 8
    %p191 = por %p189, %p190
    %p193 = scmp.ne.s32.totalorder %s176, %s192
    %p194 = scmp.eq.s32.totalorder %s30, 0
    %p195 = por %p193, %p194
    %s196 = ssub.s32 %s24, %s31
    %p197 = scmp.eq.s32.totalorder %s196, 0
    %s199 = sadd.s32 %s198, 1
    %s200 = scalar_select %p197, %s198, %s199
    %p203 = pneg %p197
    %p204 = scmp.eq.s32.totalorder %s24, 8
    %p205 = por %p203, %p204
    %p206 = scmp.ne.s32.totalorder %s198, %s201
    %p207 = scmp.eq.s32.totalorder %s24, 0
    %p208 = por %p206, %p207
    %p209 = scmp.ne.s32.totalorder %s198, %s201
    %p210 = scmp.eq.s32.totalorder %s29, 8
    %p211 = por %p209, %p210
    %p212 = scmp.ne.s32.totalorder %s201, %s202
    %p213 = scmp.eq.s32.totalorder %s29, 0
    %p214 = por %p212, %p213
    %p215 = scmp.ne.s32.totalorder %s201, %s202
    %p216 = scmp.eq.s32.totalorder %s30, 8
    %p217 = por %p215, %p216
    %p219 = scmp.ne.s32.totalorder %s202, %s218
    %p220 = scmp.eq.s32.totalorder %s30, 0
    %p221 = por %p219, %p220
    %p222 = scmp.le.s32.totalorder 1, %s24
    %p223 = scmp.lt.s32.totalorder %s24, 10
    %p224 = pnand %p222, %p223
    %p225 = pneg %p224
    // Predicated region
    $region9: #{_lambda_.1} parent=5 // pred_check
      _
    $region10: #{_lambda_.1} parent=5 // pred_check_branch
      %227 = sbr.rel (%p224) target = $region12
    $region11: #{_lambda_.1} parent=5 // pred_region
      %s228 = ssub.s32 %s24, 1
    $region12: #{_lambda_.1} parent=5 // pred_fallthru
      _
    %p229 = scmp.lt.s32.totalorder %s24, 9
    // Predicated region
    $region13: #{_lambda_.1} parent=5 // pred_check
      %p230 = pneg %p229
    $region14: #{_lambda_.1} parent=5 // pred_check_branch
      %232 = sbr.rel (%p230) target = $region16
    $region15: #{_lambda_.1} parent=5 // pred_region
      // Predicated region
      $region17: #{_lambda_.1} parent=15 // pred_check
        %p233 = pneg %p44
      $region18: #{_lambda_.1} parent=15 // pred_check_branch
        %235 = sbr.rel (%p233) target = $region20
      $region19: #{_lambda_.1} parent=15 // pred_region
        %s236 = smul.u32 32, %s24
        %p237 = scmp.lt.s32.totalorder %s236, 287
        %s238 = scalar_select %p237, %s236, 287
        %s239 = smul.addr %s238, 4
        %s240 = scalar_lea.vmem %s2, %s239
        %s241 = smul.u32 32, %s24
      $region20: #{_lambda_.1} parent=15 // pred_fallthru
        _
      // Predicated region
      $region21: #{_lambda_.1} parent=15 // pred_check
        %p242 = pneg %p70
      $region22: #{_lambda_.1} parent=15 // pred_check_branch
        %244 = sbr.rel (%p242) target = $region24
      $region23: #{_lambda_.1} parent=15 // pred_region
        %s245 = smul.u32 32, %s24
        %p246 = scmp.lt.s32.totalorder %s245, 287
        %s247 = scalar_select %p246, %s245, 287
        %s248 = smul.addr %s247, 8
        %s249 = scalar_lea.vmem %s3, %s248
        %s250 = smul.u32 32, %s24
      $region24: #{_lambda_.1} parent=15 // pred_fallthru
        _
      // Predicated region
      $region25: #{_lambda_.1} parent=15 // pred_check
        %p251 = pneg %p98
      $region26: #{_lambda_.1} parent=15 // pred_check_branch
        %253 = sbr.rel (%p251) target = $region28
      $region27: #{_lambda_.1} parent=15 // pred_region
        %s254 = sld [smem:[#allocation3 + %s24]]
        %p255 = scmp.lt.s32.totalorder %s254, 7
        %s256 = scalar_select %p255, %s254, 7
        %s257 = smul.addr %s256, 16
        %s258 = smul.addr %s257, 4
        %s259 = scalar_lea.vmem %s4, %s258
        %s260 = sld [smem:[#allocation3 + %s24]]
      $region28: #{_lambda_.1} parent=15 // pred_fallthru
        _
      // Predicated region
      $region29: #{_lambda_.1} parent=15 // pred_check
        %p261 = pneg %p126
      $region30: #{_lambda_.1} parent=15 // pred_check_branch
        %263 = sbr.rel (%p261) target = $region32
      $region31: #{_lambda_.1} parent=15 // pred_region
        %s264 = sld [smem:[#allocation3 + %s24]]
        %p265 = scmp.lt.s32.totalorder %s264, 7
        %s266 = scalar_select %p265, %s264, 7
        %s267 = scalar_lea.vmem %s5, %s266
        %s268 = sld [smem:[#allocation3 + %s24]]
      $region32: #{_lambda_.1} parent=15 // pred_fallthru
        _
      // Predicated region
      $region33: #{_lambda_.1} parent=15 // pred_check
        %p269 = pneg %p154
      $region34: #{_lambda_.1} parent=15 // pred_check_branch
        %271 = sbr.rel (%p269) target = $region36
      $region35: #{_lambda_.1} parent=15 // pred_region
        %s272 = sld [smem:[#allocation3 + %s24]]
        %p273 = scmp.lt.s32.totalorder %s272, 7
        %s274 = scalar_select %p273, %s272, 7
        %s275 = smul.addr %s274, 16
        %s276 = smul.addr %s275, 4
        %s277 = scalar_lea.vmem %s6, %s276
        %s278 = sld [smem:[#allocation3 + %s24]]
      $region36: #{_lambda_.1} parent=15 // pred_fallthru
        _
      // Predicated region
      $region37: #{_lambda_.1} parent=15 // pred_check
        %p279 = pneg %p182
      $region38: #{_lambda_.1} parent=15 // pred_check_branch
        %281 = sbr.rel (%p279) target = $region40
      $region39: #{_lambda_.1} parent=15 // pred_region
        %s282 = sld [smem:[#allocation3 + %s24]]
        %p283 = scmp.lt.s32.totalorder %s282, 7
        %s284 = scalar_select %p283, %s282, 7
        %s285 = scalar_lea.vmem %s7, %s284
        %s286 = sld [smem:[#allocation3 + %s24]]
      $region40: #{_lambda_.1} parent=15 // pred_fallthru
        _
    $region16: #{_lambda_.1} parent=5 // pred_fallthru
      _
    %p287 = scmp.le.s32.totalorder 1, %s24
    %p288 = scmp.lt.s32.totalorder %s24, 10
    %p289 = pnand %p287, %p288
    %p290 = pneg %p289
    // Predicated region
    $region41: #{_lambda_.1} parent=5 // pred_check
      _
    $region42: #{_lambda_.1} parent=5 // pred_check_branch
      %292 = sbr.rel (%p289) target = $region44
    $region43: #{_lambda_.1} parent=5 // pred_region
      %s293 = ssub.s32 %s24, 1
      %s294 = smul.u32 32, %s29
      %p295 = scmp.lt.s32.totalorder %s294, 287
      %s296 = scalar_select %p295, %s294, 287
      %s297 = smul.addr %s296, 4
      %s298 = scalar_lea.vmem %s2, %s297
      %p299 = pneg %p50
      %p300 = pneg %p47
      %s301 = smul.u32 32, %s29
      %p302 = scmp.lt.s32.totalorder %s301, 287
      %s303 = scalar_select %p302, %s301, 287
      %s304 = smul.addr %s303, 8
      %s305 = scalar_lea.vmem %s3, %s304
      %p306 = pneg %p76
      %p307 = pneg %p73
      %s308 = sld [smem:[#allocation3 + %s29]]
      %p309 = scmp.lt.s32.totalorder %s308, 7
      %s310 = scalar_select %p309, %s308, 7
      %s311 = smul.addr %s310, 16
      %s312 = smul.addr %s311, 4
      %s313 = scalar_lea.vmem %s4, %s312
      %p314 = pneg %p104
      %p315 = pneg %p101
      %s316 = sld [smem:[#allocation3 + %s29]]
      %p317 = scmp.lt.s32.totalorder %s316, 7
      %s318 = scalar_select %p317, %s316, 7
      %s319 = scalar_lea.vmem %s5, %s318
      %p320 = pneg %p132
      %p321 = pneg %p129
      %s322 = sld [smem:[#allocation3 + %s29]]
      %p323 = scmp.lt.s32.totalorder %s322, 7
      %s324 = scalar_select %p323, %s322, 7
      %s325 = smul.addr %s324, 16
      %s326 = smul.addr %s325, 4
      %s327 = scalar_lea.vmem %s6, %s326
      %p328 = pneg %p160
      %p329 = pneg %p157
      %s330 = sld [smem:[#allocation3 + %s29]]
      %p331 = scmp.lt.s32.totalorder %s330, 7
      %s332 = scalar_select %p331, %s330, 7
      %s333 = scalar_lea.vmem %s7, %s332
      %p334 = pneg %p188
      %p335 = pneg %p185
      %p336 = pneg %p214
      %p337 = pneg %p211
      %s338 = smul.u32 32, %s29
      %p339 = scmp.lt.s32.totalorder %s338, 287
      %s340 = scalar_select %p339, %s338, 287
      %s341 = smul.addr %s340, 4
      %s342 = scalar_lea.vmem %s8, %s341
      %s343 = smul.u32 32, %s29
      %p344 = scmp.lt.s32.totalorder %s343, 287
      %s345 = scalar_select %p344, %s343, 287
      %s346 = smul.addr %s345, 4
      %s347 = scalar_lea.vmem %s2, %s346
      %s348 = smul.u32 32, %s29
      %s349 = smul.u32 32, %s29
      %p350 = scmp.lt.s32.totalorder %s349, 287
      %s351 = scalar_select %p350, %s349, 287
      %s352 = smul.addr %s351, 8
      %s353 = scalar_lea.vmem %s3, %s352
      %s354 = smul.u32 32, %s29
      %s355 = sld [smem:[#allocation3 + %s29]]
      %p356 = scmp.lt.s32.totalorder %s355, 7
      %s357 = scalar_select %p356, %s355, 7
      %s358 = smul.addr %s357, 16
      %s359 = smul.addr %s358, 4
      %s360 = scalar_lea.vmem %s4, %s359
      %s361 = sld [smem:[#allocation3 + %s29]]
      %s362 = sld [smem:[#allocation3 + %s29]]
      %p363 = scmp.lt.s32.totalorder %s362, 7
      %s364 = scalar_select %p363, %s362, 7
      %s365 = scalar_lea.vmem %s5, %s364
      %s366 = sld [smem:[#allocation3 + %s29]]
      %s367 = sld [smem:[#allocation3 + %s29]]
      %p368 = scmp.lt.s32.totalorder %s367, 7
      %s369 = scalar_select %p368, %s367, 7
      %s370 = smul.addr %s369, 16
      %s371 = smul.addr %s370, 4
      %s372 = scalar_lea.vmem %s6, %s371
      %s373 = sld [smem:[#allocation3 + %s29]]
      %s374 = sld [smem:[#allocation3 + %s29]]
      %p375 = scmp.lt.s32.totalorder %s374, 7
      %s376 = scalar_select %p375, %s374, 7
      %s377 = scalar_lea.vmem %s7, %s376
      %s378 = sld [smem:[#allocation3 + %s29]]
      %s379 = smul.u32 32, %s29
      %p380 = scmp.lt.s32.totalorder %s379, 287
      %s381 = scalar_select %p380, %s379, 287
      %s382 = smul.addr %s381, 4
      %s383 = scalar_lea.vmem %s8, %s382
      %s384 = smul.u32 32, %s29
      %s386 = sld [smem:[#allocation4 + %s29]]
      %p387 = scmp.gt.s32.totalorder %s386, 0
      // Predicated region
      $region45: #{_lambda_.1} parent=43 // pred_check
        %p388 = pneg %p387
      $region46: #{_lambda_.1} parent=43 // pred_check_branch
        %390 = sbr.rel (%p388) target = $region48
      $region47: #{_lambda_.1} parent=43 // pred_region
        %v391 = vld [vmem:[%s347] sm:$0xf]
        %v392 = vld [vmem:[%s347 + $0x4] sm:$0xf]
        %v393 = vld [vmem:[%s347 + $0x8] sm:$0xf]
        %v394 = vld [vmem:[%s347 + $0xc] sm:$0xf]
        %v395 = vld [vmem:[%s347 + $0x10] sm:$0xf]
        %v396 = vld [vmem:[%s347 + $0x14] sm:$0xf]
        %v397 = vld [vmem:[%s347 + $0x18] sm:$0xf]
        %v398 = vld [vmem:[%s347 + $0x1c] sm:$0xf]
        %v399 = vld [vmem:[%s347 + $0x20] sm:$0xf]
        %v400 = vld [vmem:[%s347 + $0x24] sm:$0xf]
        %v401 = vld [vmem:[%s347 + $0x28] sm:$0xf]
        %v402 = vld [vmem:[%s347 + $0x2c] sm:$0xf]
        %v403 = vld [vmem:[%s347 + $0x30] sm:$0xf]
        %v404 = vld [vmem:[%s347 + $0x34] sm:$0xf]
        %v405 = vld [vmem:[%s347 + $0x38] sm:$0xf]
        %v406 = vld [vmem:[%s347 + $0x3c] sm:$0xf]
        %v407 = vld [vmem:[%s347 + $0x40] sm:$0xf]
        %v408 = vld [vmem:[%s347 + $0x44] sm:$0xf]
        %v409 = vld [vmem:[%s347 + $0x48] sm:$0xf]
        %v410 = vld [vmem:[%s347 + $0x4c] sm:$0xf]
        %v411 = vld [vmem:[%s347 + $0x50] sm:$0xf]
        %v412 = vld [vmem:[%s347 + $0x54] sm:$0xf]
        %v413 = vld [vmem:[%s347 + $0x58] sm:$0xf]
        %v414 = vld [vmem:[%s347 + $0x5c] sm:$0xf]
        %v415 = vld [vmem:[%s347 + $0x60] sm:$0xf]
        %v416 = vld [vmem:[%s347 + $0x64] sm:$0xf]
        %v417 = vld [vmem:[%s347 + $0x68] sm:$0xf]
        %v418 = vld [vmem:[%s347 + $0x6c] sm:$0xf]
        %v419 = vld [vmem:[%s347 + $0x70] sm:$0xf]
        %v420 = vld [vmem:[%s347 + $0x74] sm:$0xf]
        %v421 = vld [vmem:[%s347 + $0x78] sm:$0xf]
        %v422 = vld [vmem:[%s347 + $0x7c] sm:$0xf]
        %v423 = vld [vmem:[%s353] sm:$0xff]
        %v424 = vld [vmem:[%s353 + $0x8] sm:$0xff]
        %v425 = vld [vmem:[%s353 + $0x10] sm:$0xff]
        %v426 = vld [vmem:[%s353 + $0x18] sm:$0xff]
        %v427 = vld [vmem:[%s353 + $0x20] sm:$0xff]
        %v428 = vld [vmem:[%s353 + $0x28] sm:$0xff]
        %v429 = vld [vmem:[%s353 + $0x30] sm:$0xff]
        %v430 = vld [vmem:[%s353 + $0x38] sm:$0xff]
        %v431 = vld [vmem:[%s353 + $0x40] sm:$0xff]
        %v432 = vld [vmem:[%s353 + $0x48] sm:$0xff]
        %v433 = vld [vmem:[%s353 + $0x50] sm:$0xff]
        %v434 = vld [vmem:[%s353 + $0x58] sm:$0xff]
        %v435 = vld [vmem:[%s353 + $0x60] sm:$0xff]
        %v436 = vld [vmem:[%s353 + $0x68] sm:$0xff]
        %v437 = vld [vmem:[%s353 + $0x70] sm:$0xff]
        %v438 = vld [vmem:[%s353 + $0x78] sm:$0xff]
        %v439 = vld [vmem:[%s353 + $0x80] sm:$0xff]
        %v440 = vld [vmem:[%s353 + $0x88] sm:$0xff]
        %v441 = vld [vmem:[%s353 + $0x90] sm:$0xff]
        %v442 = vld [vmem:[%s353 + $0x98] sm:$0xff]
        %v443 = vld [vmem:[%s353 + $0xa0] sm:$0xff]
        %v444 = vld [vmem:[%s353 + $0xa8] sm:$0xff]
        %v445 = vld [vmem:[%s353 + $0xb0] sm:$0xff]
        %v446 = vld [vmem:[%s353 + $0xb8] sm:$0xff]
        %v447 = vld [vmem:[%s353 + $0xc0] sm:$0xff]
        %v448 = vld [vmem:[%s353 + $0xc8] sm:$0xff]
        %v449 = vld [vmem:[%s353 + $0xd0] sm:$0xff]
        %v450 = vld [vmem:[%s353 + $0xd8] sm:$0xff]
        %v451 = vld [vmem:[%s353 + $0xe0] sm:$0xff]
        %v452 = vld [vmem:[%s353 + $0xe8] sm:$0xff]
        %v453 = vld [vmem:[%s353 + $0xf0] sm:$0xff]
        %v454 = vld [vmem:[%s353 + $0xf8] sm:$0xff]
        %v455 = vld [vmem:[%s360] sm:$0xf]
        %v456 = vld [vmem:[%s360 + $0x4] sm:$0xf]
        %v457 = vld [vmem:[%s360 + $0x8] sm:$0xf]
        %v458 = vld [vmem:[%s360 + $0xc] sm:$0xf]
        %v459 = vld [vmem:[%s360 + $0x10] sm:$0xf]
        %v460 = vld [vmem:[%s360 + $0x14] sm:$0xf]
        %v461 = vld [vmem:[%s360 + $0x18] sm:$0xf]
        %v462 = vld [vmem:[%s360 + $0x1c] sm:$0xf]
        %v463 = vld [vmem:[%s360 + $0x20] sm:$0xf]
        %v464 = vld [vmem:[%s360 + $0x24] sm:$0xf]
        %v465 = vld [vmem:[%s360 + $0x28] sm:$0xf]
        %v466 = vld [vmem:[%s360 + $0x2c] sm:$0xf]
        %v467 = vld [vmem:[%s360 + $0x30] sm:$0xf]
        %v468 = vld [vmem:[%s360 + $0x34] sm:$0xf]
        %v469 = vld [vmem:[%s360 + $0x38] sm:$0xf]
        %v470 = vld [vmem:[%s360 + $0x3c] sm:$0xf]
        %v471 = vld [vmem:[%s365] sm:$0x1]
        %v472 = vld [vmem:[%s372] sm:$0xf]
        %v473 = vld [vmem:[%s372 + $0x4] sm:$0xf]
        %v474 = vld [vmem:[%s372 + $0x8] sm:$0xf]
        %v475 = vld [vmem:[%s372 + $0xc] sm:$0xf]
        %v476 = vld [vmem:[%s372 + $0x10] sm:$0xf]
        %v477 = vld [vmem:[%s372 + $0x14] sm:$0xf]
        %v478 = vld [vmem:[%s372 + $0x18] sm:$0xf]
        %v479 = vld [vmem:[%s372 + $0x1c] sm:$0xf]
        %v480 = vld [vmem:[%s372 + $0x20] sm:$0xf]
        %v481 = vld [vmem:[%s372 + $0x24] sm:$0xf]
        %v482 = vld [vmem:[%s372 + $0x28] sm:$0xf]
        %v483 = vld [vmem:[%s372 + $0x2c] sm:$0xf]
        %v484 = vld [vmem:[%s372 + $0x30] sm:$0xf]
        %v485 = vld [vmem:[%s372 + $0x34] sm:$0xf]
        %v486 = vld [vmem:[%s372 + $0x38] sm:$0xf]
        %v487 = vld [vmem:[%s372 + $0x3c] sm:$0xf]
        %v488 = vld [vmem:[%s377] sm:$0x1]
        %v490 = vlaneseq
        %v491 = vshrl.u32 %v490, 7
        %v492 = vsub.s32 0, %v491
        %v493 = vrot.slane %v471, %v492
        %v527 = vunpack.c.l.b16 %v391
        %v528 = vunpack.c.l.b16 %v392
        %v529 = vunpack.c.l.b16 %v393
        %v530 = vunpack.c.l.b16 %v394
        %v531 = vunpack.c.l.b16 %v395
        %v532 = vunpack.c.l.b16 %v396
        %v533 = vunpack.c.l.b16 %v397
        %v534 = vunpack.c.l.b16 %v398
        %v535 = vunpack.c.l.b16 %v399
        %v536 = vunpack.c.l.b16 %v400
        %v537 = vunpack.c.l.b16 %v401
        %v538 = vunpack.c.l.b16 %v402
        %v539 = vunpack.c.l.b16 %v403
        %v540 = vunpack.c.l.b16 %v404
        %v541 = vunpack.c.l.b16 %v405
        %v542 = vunpack.c.l.b16 %v406
        %v543 = vunpack.c.l.b16 %v407
        %v544 = vunpack.c.l.b16 %v408
        %v545 = vunpack.c.l.b16 %v409
        %v546 = vunpack.c.l.b16 %v410
        %v547 = vunpack.c.l.b16 %v411
        %v548 = vunpack.c.l.b16 %v412
        %v549 = vunpack.c.l.b16 %v413
        %v550 = vunpack.c.l.b16 %v414
        %v551 = vunpack.c.l.b16 %v415
        %v552 = vunpack.c.l.b16 %v416
        %v553 = vunpack.c.l.b16 %v417
        %v554 = vunpack.c.l.b16 %v418
        %v555 = vunpack.c.l.b16 %v419
        %v556 = vunpack.c.l.b16 %v420
        %v557 = vunpack.c.l.b16 %v421
        %v558 = vunpack.c.l.b16 %v422
        %v559 = vpack.c.b16 %v528, %v527
        %v560 = vpack.c.b16 %v530, %v529
        %v561 = vpack.c.b16 %v532, %v531
        %v562 = vpack.c.b16 %v534, %v533
        %v563 = vpack.c.b16 %v536, %v535
        %v564 = vpack.c.b16 %v538, %v537
        %v565 = vpack.c.b16 %v540, %v539
        %v566 = vpack.c.b16 %v542, %v541
        %v567 = vpack.c.b16 %v544, %v543
        %v568 = vpack.c.b16 %v546, %v545
        %v569 = vpack.c.b16 %v548, %v547
        %v570 = vpack.c.b16 %v550, %v549
        %v571 = vpack.c.b16 %v552, %v551
        %v572 = vpack.c.b16 %v554, %v553
        %v573 = vpack.c.b16 %v556, %v555
        %v574 = vpack.c.b16 %v558, %v557
        %v607 = vunpack.c.l.b16 %v455
        %v608 = vunpack.c.l.b16 %v456
        %v609 = vunpack.c.l.b16 %v457
        %v610 = vunpack.c.l.b16 %v458
        %v611 = vunpack.c.l.b16 %v459
        %v612 = vunpack.c.l.b16 %v460
        %v613 = vunpack.c.l.b16 %v461
        %v614 = vunpack.c.l.b16 %v462
        %v615 = vunpack.c.l.b16 %v463
        %v616 = vunpack.c.l.b16 %v464
        %v617 = vunpack.c.l.b16 %v465
        %v618 = vunpack.c.l.b16 %v466
        %v619 = vunpack.c.l.b16 %v467
        %v620 = vunpack.c.l.b16 %v468
        %v621 = vunpack.c.l.b16 %v469
        %v622 = vunpack.c.l.b16 %v470
        %v623 = vpack.c.b16 %v608, %v607
        %v624 = vpack.c.b16 %v610, %v609
        %v625 = vpack.c.b16 %v612, %v611
        %v626 = vpack.c.b16 %v614, %v613
        %v627 = vpack.c.b16 %v616, %v615
        %v628 = vpack.c.b16 %v618, %v617
        %v629 = vpack.c.b16 %v620, %v619
        %v630 = vpack.c.b16 %v622, %v621
        %639 = vmatprep.subr.bf16.mxu0 0
        %640 = vmatpush1.bf16.msra.mxu0 %v623
        %641 = vmatprep.subr.bf16.mxu0 0
        %642 = vmatpush1.bf16.msra.mxu0 %v624
        %643 = vmatprep.subr.bf16.mxu0 0
        %644 = vmatpush1.bf16.msra.mxu0 %v625
        %645 = vmatprep.subr.bf16.mxu0 0
        %646 = vmatpush1.bf16.msra.mxu0 %v626
        %647 = vmatprep.subr.bf16.mxu0 0
        %648 = vmatpush1.bf16.msra.mxu0 %v627
        %649 = vmatprep.subr.bf16.mxu0 0
        %650 = vmatpush1.bf16.msra.mxu0 %v628
        %651 = vmatprep.subr.bf16.mxu0 0
        %652 = vmatpush1.bf16.msra.mxu0 %v629
        %653 = vmatprep.subr.bf16.mxu0 0
        %654 = vmatpush1.bf16.msra.mxu0 %v630
        %655 = vmatprep.subr.bf16.mxu0 0
        %656 = vmatpush1.bf16.msra.mxu0 0
        %657 = vmatprep.subr.bf16.mxu0 0
        %658 = vmatpush1.bf16.msra.mxu0 0
        %659 = vmatprep.subr.bf16.mxu0 0
        %660 = vmatpush1.bf16.msra.mxu0 0
        %661 = vmatprep.subr.bf16.mxu0 0
        %662 = vmatpush1.bf16.msra.mxu0 0
        %663 = vmatprep.subr.bf16.mxu0 0
        %664 = vmatpush1.bf16.msra.mxu0 0
        %665 = vmatprep.subr.bf16.mxu0 0
        %666 = vmatpush1.bf16.msra.mxu0 0
        %667 = vmatprep.subr.bf16.mxu0 0
        %668 = vmatpush1.bf16.msra.mxu0 0
        %669 = vmatprep.subr.bf16.mxu0 0
        %670 = vmatpush1.bf16.msra.mxu0 0
        %671 = vmatprep.mubr.bf16.mxu0 0
        %672 = vmatmul.mubr.bf16.gmra.mrb[0].mxu0 %v559
        %v673 = vpop.f32.mrb[0].mxu0
        %v674 = vadd.f32 %v493, %v673
        %v675 = vpop.f32.mrb[0].mxu0
        %v676 = vpop.f32.mrb[0].mxu0
        %v677 = vadd.f32 %v493, %v676
        %v678 = vpop.f32.mrb[0].mxu0
        %679 = vmatprep.mubr.bf16.mxu0 0
        %680 = vmatmul.mubr.bf16.gmra.mrb[0].mxu0 %v560
        %v681 = vpop.f32.mrb[0].mxu0
        %v682 = vadd.f32 %v493, %v681
        %v683 = vpop.f32.mrb[0].mxu0
        %v684 = vpop.f32.mrb[0].mxu0
        %v685 = vadd.f32 %v493, %v684
        %v686 = vpop.f32.mrb[0].mxu0
        %687 = vmatprep.mubr.bf16.mxu0 0
        %688 = vmatmul.mubr.bf16.gmra.mrb[0].mxu0 %v561
        %v689 = vpop.f32.mrb[0].mxu0
        %v690 = vadd.f32 %v493, %v689
        %v691 = vpop.f32.mrb[0].mxu0
        %v692 = vpop.f32.mrb[0].mxu0
        %v693 = vadd.f32 %v493, %v692
        %v694 = vpop.f32.mrb[0].mxu0
        %695 = vmatprep.mubr.bf16.mxu0 0
        %696 = vmatmul.mubr.bf16.gmra.mrb[0].mxu0 %v562
        %v697 = vpop.f32.mrb[0].mxu0
        %v698 = vadd.f32 %v493, %v697
        %v699 = vpop.f32.mrb[0].mxu0
        %v700 = vpop.f32.mrb[0].mxu0
        %v701 = vadd.f32 %v493, %v700
        %v702 = vpop.f32.mrb[0].mxu0
        %703 = vmatprep.mubr.bf16.mxu0 0
        %704 = vmatmul.mubr.bf16.gmra.mrb[0].mxu0 %v563
        %v705 = vpop.f32.mrb[0].mxu0
        %v706 = vadd.f32 %v493, %v705
        %v707 = vpop.f32.mrb[0].mxu0
        %v708 = vpop.f32.mrb[0].mxu0
        %v709 = vadd.f32 %v493, %v708
        %v710 = vpop.f32.mrb[0].mxu0
        %711 = vmatprep.mubr.bf16.mxu0 0
        %712 = vmatmul.mubr.bf16.gmra.mrb[0].mxu0 %v564
        %v713 = vpop.f32.mrb[0].mxu0
        %v714 = vadd.f32 %v493, %v713
        %v715 = vpop.f32.mrb[0].mxu0
        %v716 = vpop.f32.mrb[0].mxu0
        %v717 = vadd.f32 %v493, %v716
        %v718 = vpop.f32.mrb[0].mxu0
        %719 = vmatprep.mubr.bf16.mxu0 0
        %720 = vmatmul.mubr.bf16.gmra.mrb[0].mxu0 %v565
        %v721 = vpop.f32.mrb[0].mxu0
        %v722 = vadd.f32 %v493, %v721
        %v723 = vpop.f32.mrb[0].mxu0
        %v724 = vpop.f32.mrb[0].mxu0
        %v725 = vadd.f32 %v493, %v724
        %v726 = vpop.f32.mrb[0].mxu0
        %727 = vmatprep.mubr.bf16.mxu0 0
        %728 = vmatmul.mubr.bf16.gmra.mrb[0].mxu0 %v566
        %v729 = vpop.f32.mrb[0].mxu0
        %v730 = vadd.f32 %v493, %v729
        %v731 = vpop.f32.mrb[0].mxu0
        %v732 = vpop.f32.mrb[0].mxu0
        %v733 = vadd.f32 %v493, %v732
        %v734 = vpop.f32.mrb[0].mxu0
        %735 = vmatprep.mubr.bf16.mxu0 0
        %736 = vmatmul.mubr.bf16.gmra.mrb[0].mxu0 %v567
        %v737 = vpop.f32.mrb[0].mxu0
        %v738 = vadd.f32 %v493, %v737
        %v739 = vpop.f32.mrb[0].mxu0
        %v740 = vpop.f32.mrb[0].mxu0
        %v741 = vadd.f32 %v493, %v740
        %v742 = vpop.f32.mrb[0].mxu0
        %743 = vmatprep.mubr.bf16.mxu0 0
        %744 = vmatmul.mubr.bf16.gmra.mrb[0].mxu0 %v568
        %v745 = vpop.f32.mrb[0].mxu0
        %v746 = vadd.f32 %v493, %v745
        %v747 = vpop.f32.mrb[0].mxu0
        %v748 = vpop.f32.mrb[0].mxu0
        %v749 = vadd.f32 %v493, %v748
        %v750 = vpop.f32.mrb[0].mxu0
        %751 = vmatprep.mubr.bf16.mxu0 0
        %752 = vmatmul.mubr.bf16.gmra.mrb[0].mxu0 %v569
        %v753 = vpop.f32.mrb[0].mxu0
        %v754 = vadd.f32 %v493, %v753
        %v755 = vpop.f32.mrb[0].mxu0
        %v756 = vpop.f32.mrb[0].mxu0
        %v757 = vadd.f32 %v493, %v756
        %v758 = vpop.f32.mrb[0].mxu0
        %759 = vmatprep.mubr.bf16.mxu0 0
        %760 = vmatmul.mubr.bf16.gmra.mrb[0].mxu0 %v570
        %v761 = vpop.f32.mrb[0].mxu0
        %v762 = vadd.f32 %v493, %v761
        %v763 = vpop.f32.mrb[0].mxu0
        %v764 = vpop.f32.mrb[0].mxu0
        %v765 = vadd.f32 %v493, %v764
        %v766 = vpop.f32.mrb[0].mxu0
        %767 = vmatprep.mubr.bf16.mxu0 0
        %768 = vmatmul.mubr.bf16.gmra.mrb[0].mxu0 %v571
        %v769 = vpop.f32.mrb[0].mxu0
        %v770 = vadd.f32 %v493, %v769
        %v771 = vpop.f32.mrb[0].mxu0
        %v772 = vpop.f32.mrb[0].mxu0
        %v773 = vadd.f32 %v493, %v772
        %v774 = vpop.f32.mrb[0].mxu0
        %775 = vmatprep.mubr.bf16.mxu0 0
        %776 = vmatmul.mubr.bf16.gmra.mrb[0].mxu0 %v572
        %v777 = vpop.f32.mrb[0].mxu0
        %v778 = vadd.f32 %v493, %v777
        %v779 = vpop.f32.mrb[0].mxu0
        %v780 = vpop.f32.mrb[0].mxu0
        %v781 = vadd.f32 %v493, %v780
        %v782 = vpop.f32.mrb[0].mxu0
        %783 = vmatprep.mubr.bf16.mxu0 0
        %784 = vmatmul.mubr.bf16.gmra.mrb[0].mxu0 %v573
        %v785 = vpop.f32.mrb[0].mxu0
        %v786 = vadd.f32 %v493, %v785
        %v787 = vpop.f32.mrb[0].mxu0
        %v788 = vpop.f32.mrb[0].mxu0
        %v789 = vadd.f32 %v493, %v788
        %v790 = vpop.f32.mrb[0].mxu0
        %791 = vmatprep.mubr.bf16.mxu0 0
        %792 = vmatmul.mubr.bf16.gmra.mrb[0].mxu0 %v574
        %v793 = vpop.f32.mrb[0].mxu0
        %v794 = vadd.f32 %v493, %v793
        %v795 = vpop.f32.mrb[0].mxu0
        %v796 = vpop.f32.mrb[0].mxu0
        %v797 = vadd.f32 %v493, %v796
        %v798 = vpop.f32.mrb[0].mxu0
        %799 = vdwg.mxu0
        %v800 = vmax.f32 %v674, 0.0
        %v801 = vmax.f32 %v677, 0.0
        %v802 = vmax.f32 %v682, 0.0
        %v803 = vmax.f32 %v685, 0.0
        %v804 = vmax.f32 %v690, 0.0
        %v805 = vmax.f32 %v693, 0.0
        %v806 = vmax.f32 %v698, 0.0
        %v807 = vmax.f32 %v701, 0.0
        %v808 = vmax.f32 %v706, 0.0
        %v809 = vmax.f32 %v709, 0.0
        %v810 = vmax.f32 %v714, 0.0
        %v811 = vmax.f32 %v717, 0.0
        %v812 = vmax.f32 %v722, 0.0
        %v813 = vmax.f32 %v725, 0.0
        %v814 = vmax.f32 %v730, 0.0
        %v815 = vmax.f32 %v733, 0.0
        %v816 = vmax.f32 %v738, 0.0
        %v817 = vmax.f32 %v741, 0.0
        %v818 = vmax.f32 %v746, 0.0
        %v819 = vmax.f32 %v749, 0.0
        %v820 = vmax.f32 %v754, 0.0
        %v821 = vmax.f32 %v757, 0.0
        %v822 = vmax.f32 %v762, 0.0
        %v823 = vmax.f32 %v765, 0.0
        %v824 = vmax.f32 %v770, 0.0
        %v825 = vmax.f32 %v773, 0.0
        %v826 = vmax.f32 %v778, 0.0
        %v827 = vmax.f32 %v781, 0.0
        %v828 = vmax.f32 %v786, 0.0
        %v829 = vmax.f32 %v789, 0.0
        %v830 = vmax.f32 %v794, 0.0
        %v831 = vmax.f32 %v797, 0.0
        %v832 = vpack.c.bf16 %v801, %v800
        %v833 = vpack.c.bf16 %v803, %v802
        %v834 = vpack.c.bf16 %v805, %v804
        %v835 = vpack.c.bf16 %v807, %v806
        %v836 = vpack.c.bf16 %v809, %v808
        %v837 = vpack.c.bf16 %v811, %v810
        %v838 = vpack.c.bf16 %v813, %v812
        %v839 = vpack.c.bf16 %v815, %v814
        %v840 = vpack.c.bf16 %v817, %v816
        %v841 = vpack.c.bf16 %v819, %v818
        %v842 = vpack.c.bf16 %v821, %v820
        %v843 = vpack.c.bf16 %v823, %v822
        %v844 = vpack.c.bf16 %v825, %v824
        %v845 = vpack.c.bf16 %v827, %v826
        %v846 = vpack.c.bf16 %v829, %v828
        %v847 = vpack.c.bf16 %v831, %v830
        %v849 = vlaneseq
        %v850 = vshrl.u32 %v849, 7
        %v851 = vsub.s32 0, %v850
        %v852 = vrot.slane %v488, %v851
        %v870 = vunpack.c.l.b16 %v472
        %v871 = vunpack.c.l.b16 %v473
        %v872 = vunpack.c.l.b16 %v474
        %v873 = vunpack.c.l.b16 %v475
        %v874 = vunpack.c.l.b16 %v476
        %v875 = vunpack.c.l.b16 %v477
        %v876 = vunpack.c.l.b16 %v478
        %v877 = vunpack.c.l.b16 %v479
        %v878 = vunpack.c.l.b16 %v480
        %v879 = vunpack.c.l.b16 %v481
        %v880 = vunpack.c.l.b16 %v482
        %v881 = vunpack.c.l.b16 %v483
        %v882 = vunpack.c.l.b16 %v484
        %v883 = vunpack.c.l.b16 %v485
        %v884 = vunpack.c.l.b16 %v486
        %v885 = vunpack.c.l.b16 %v487
        %v886 = vpack.c.b16 %v871, %v870
        %v887 = vpack.c.b16 %v873, %v872
        %v888 = vpack.c.b16 %v875, %v874
        %v889 = vpack.c.b16 %v877, %v876
        %v890 = vpack.c.b16 %v879, %v878
        %v891 = vpack.c.b16 %v881, %v880
        %v892 = vpack.c.b16 %v883, %v882
        %v893 = vpack.c.b16 %v885, %v884
        %902 = vmatprep.subr.bf16.mxu0 0
        %903 = vmatpush1.bf16.msra.mxu0 %v886
        %904 = vmatprep.subr.bf16.mxu0 0
        %905 = vmatpush1.bf16.msra.mxu0 %v887
        %906 = vmatprep.subr.bf16.mxu0 0
        %907 = vmatpush1.bf16.msra.mxu0 %v888
        %908 = vmatprep.subr.bf16.mxu0 0
        %909 = vmatpush1.bf16.msra.mxu0 %v889
        %910 = vmatprep.subr.bf16.mxu0 0
        %911 = vmatpush1.bf16.msra.mxu0 %v890
        %912 = vmatprep.subr.bf16.mxu0 0
        %913 = vmatpush1.bf16.msra.mxu0 %v891
        %914 = vmatprep.subr.bf16.mxu0 0
        %915 = vmatpush1.bf16.msra.mxu0 %v892
        %916 = vmatprep.subr.bf16.mxu0 0
        %917 = vmatpush1.bf16.msra.mxu0 %v893
        %918 = vmatprep.subr.bf16.mxu0 0
        %919 = vmatpush1.bf16.msra.mxu0 0
        %920 = vmatprep.subr.bf16.mxu0 0
        %921 = vmatpush1.bf16.msra.mxu0 0
        %922 = vmatprep.subr.bf16.mxu0 0
        %923 = vmatpush1.bf16.msra.mxu0 0
        %924 = vmatprep.subr.bf16.mxu0 0
        %925 = vmatpush1.bf16.msra.mxu0 0
        %926 = vmatprep.subr.bf16.mxu0 0
        %927 = vmatpush1.bf16.msra.mxu0 0
        %928 = vmatprep.subr.bf16.mxu0 0
        %929 = vmatpush1.bf16.msra.mxu0 0
        %930 = vmatprep.subr.bf16.mxu0 0
        %931 = vmatpush1.bf16.msra.mxu0 0
        %932 = vmatprep.subr.bf16.mxu0 0
        %933 = vmatpush1.bf16.msra.mxu0 0
        %934 = vmatprep.mubr.bf16.mxu0 0
        %935 = vmatmul.mubr.bf16.gmra.mrb[0].mxu0 %v832
        %v936 = vpop.f32.mrb[0].mxu0
        %v937 = vadd.f32 %v852, %v936
        %v938 = vpop.f32.mrb[0].mxu0
        %v939 = vpop.f32.mrb[0].mxu0
        %v940 = vadd.f32 %v852, %v939
        %v941 = vpop.f32.mrb[0].mxu0
        %942 = vmatprep.mubr.bf16.mxu0 0
        %943 = vmatmul.mubr.bf16.gmra.mrb[0].mxu0 %v833
        %v944 = vpop.f32.mrb[0].mxu0
        %v945 = vadd.f32 %v852, %v944
        %v946 = vpop.f32.mrb[0].mxu0
        %v947 = vpop.f32.mrb[0].mxu0
        %v948 = vadd.f32 %v852, %v947
        %v949 = vpop.f32.mrb[0].mxu0
        %950 = vmatprep.mubr.bf16.mxu0 0
        %951 = vmatmul.mubr.bf16.gmra.mrb[0].mxu0 %v834
        %v952 = vpop.f32.mrb[0].mxu0
        %v953 = vadd.f32 %v852, %v952
        %v954 = vpop.f32.mrb[0].mxu0
        %v955 = vpop.f32.mrb[0].mxu0
        %v956 = vadd.f32 %v852, %v955
        %v957 = vpop.f32.mrb[0].mxu0
        %958 = vmatprep.mubr.bf16.mxu0 0
        %959 = vmatmul.mubr.bf16.gmra.mrb[0].mxu0 %v835
        %v960 = vpop.f32.mrb[0].mxu0
        %v961 = vadd.f32 %v852, %v960
        %v962 = vpop.f32.mrb[0].mxu0
        %v963 = vpop.f32.mrb[0].mxu0
        %v964 = vadd.f32 %v852, %v963
        %v965 = vpop.f32.mrb[0].mxu0
        %966 = vmatprep.mubr.bf16.mxu0 0
        %967 = vmatmul.mubr.bf16.gmra.mrb[0].mxu0 %v836
        %v968 = vpop.f32.mrb[0].mxu0
        %v969 = vadd.f32 %v852, %v968
        %v970 = vpop.f32.mrb[0].mxu0
        %v971 = vpop.f32.mrb[0].mxu0
        %v972 = vadd.f32 %v852, %v971
        %v973 = vpop.f32.mrb[0].mxu0
        %974 = vmatprep.mubr.bf16.mxu0 0
        %975 = vmatmul.mubr.bf16.gmra.mrb[0].mxu0 %v837
        %v976 = vpop.f32.mrb[0].mxu0
        %v977 = vadd.f32 %v852, %v976
        %v978 = vpop.f32.mrb[0].mxu0
        %v979 = vpop.f32.mrb[0].mxu0
        %v980 = vadd.f32 %v852, %v979
        %v981 = vpop.f32.mrb[0].mxu0
        %982 = vmatprep.mubr.bf16.mxu0 0
        %983 = vmatmul.mubr.bf16.gmra.mrb[0].mxu0 %v838
        %v984 = vpop.f32.mrb[0].mxu0
        %v985 = vadd.f32 %v852, %v984
        %v986 = vpop.f32.mrb[0].mxu0
        %v987 = vpop.f32.mrb[0].mxu0
        %v988 = vadd.f32 %v852, %v987
        %v989 = vpop.f32.mrb[0].mxu0
        %990 = vmatprep.mubr.bf16.mxu0 0
        %991 = vmatmul.mubr.bf16.gmra.mrb[0].mxu0 %v839
        %v992 = vpop.f32.mrb[0].mxu0
        %v993 = vadd.f32 %v852, %v992
        %v994 = vpop.f32.mrb[0].mxu0
        %v995 = vpop.f32.mrb[0].mxu0
        %v996 = vadd.f32 %v852, %v995
        %v997 = vpop.f32.mrb[0].mxu0
        %998 = vmatprep.mubr.bf16.mxu0 0
        %999 = vmatmul.mubr.bf16.gmra.mrb[0].mxu0 %v840
        %v1000 = vpop.f32.mrb[0].mxu0
        %v1001 = vadd.f32 %v852, %v1000
        %v1002 = vpop.f32.mrb[0].mxu0
        %v1003 = vpop.f32.mrb[0].mxu0
        %v1004 = vadd.f32 %v852, %v1003
        %v1005 = vpop.f32.mrb[0].mxu0
        %1006 = vmatprep.mubr.bf16.mxu0 0
        %1007 = vmatmul.mubr.bf16.gmra.mrb[0].mxu0 %v841
        %v1008 = vpop.f32.mrb[0].mxu0
        %v1009 = vadd.f32 %v852, %v1008
        %v1010 = vpop.f32.mrb[0].mxu0
        %v1011 = vpop.f32.mrb[0].mxu0
        %v1012 = vadd.f32 %v852, %v1011
        %v1013 = vpop.f32.mrb[0].mxu0
        %1014 = vmatprep.mubr.bf16.mxu0 0
        %1015 = vmatmul.mubr.bf16.gmra.mrb[0].mxu0 %v842
        %v1016 = vpop.f32.mrb[0].mxu0
        %v1017 = vadd.f32 %v852, %v1016
        %v1018 = vpop.f32.mrb[0].mxu0
        %v1019 = vpop.f32.mrb[0].mxu0
        %v1020 = vadd.f32 %v852, %v1019
        %v1021 = vpop.f32.mrb[0].mxu0
        %1022 = vmatprep.mubr.bf16.mxu0 0
        %1023 = vmatmul.mubr.bf16.gmra.mrb[0].mxu0 %v843
        %v1024 = vpop.f32.mrb[0].mxu0
        %v1025 = vadd.f32 %v852, %v1024
        %v1026 = vpop.f32.mrb[0].mxu0
        %v1027 = vpop.f32.mrb[0].mxu0
        %v1028 = vadd.f32 %v852, %v1027
        %v1029 = vpop.f32.mrb[0].mxu0
        %1030 = vmatprep.mubr.bf16.mxu0 0
        %1031 = vmatmul.mubr.bf16.gmra.mrb[0].mxu0 %v844
        %v1032 = vpop.f32.mrb[0].mxu0
        %v1033 = vadd.f32 %v852, %v1032
        %v1034 = vpop.f32.mrb[0].mxu0
        %v1035 = vpop.f32.mrb[0].mxu0
        %v1036 = vadd.f32 %v852, %v1035
        %v1037 = vpop.f32.mrb[0].mxu0
        %1038 = vmatprep.mubr.bf16.mxu0 0
        %1039 = vmatmul.mubr.bf16.gmra.mrb[0].mxu0 %v845
        %v1040 = vpop.f32.mrb[0].mxu0
        %v1041 = vadd.f32 %v852, %v1040
        %v1042 = vpop.f32.mrb[0].mxu0
        %v1043 = vpop.f32.mrb[0].mxu0
        %v1044 = vadd.f32 %v852, %v1043
        %v1045 = vpop.f32.mrb[0].mxu0
        %1046 = vmatprep.mubr.bf16.mxu0 0
        %1047 = vmatmul.mubr.bf16.gmra.mrb[0].mxu0 %v846
        %v1048 = vpop.f32.mrb[0].mxu0
        %v1049 = vadd.f32 %v852, %v1048
        %v1050 = vpop.f32.mrb[0].mxu0
        %v1051 = vpop.f32.mrb[0].mxu0
        %v1052 = vadd.f32 %v852, %v1051
        %v1053 = vpop.f32.mrb[0].mxu0
        %1054 = vmatprep.mubr.bf16.mxu0 0
        %1055 = vmatmul.mubr.bf16.gmra.mrb[0].mxu0 %v847
        %v1056 = vpop.f32.mrb[0].mxu0
        %v1057 = vadd.f32 %v852, %v1056
        %v1058 = vpop.f32.mrb[0].mxu0
        %v1059 = vpop.f32.mrb[0].mxu0
        %v1060 = vadd.f32 %v852, %v1059
        %v1061 = vpop.f32.mrb[0].mxu0
        %1062 = vdwg.mxu0
        %1064 = vset.pattern.permute.xlu0 0
        %1065 = vperm.xlu0 %1064, %v423
        %v1066 = vpop.permute.xlu0 %1065
        %1069 = vset.pattern.permute.xlu0 0
        %1070 = vperm.xlu0 %1069, %v424
        %v1071 = vpop.permute.xlu0 %1070
        %1074 = vset.pattern.permute.xlu0 0
        %1075 = vperm.xlu0 %1074, %v425
        %v1076 = vpop.permute.xlu0 %1075
        %1079 = vset.pattern.permute.xlu0 0
        %1080 = vperm.xlu0 %1079, %v426
        %v1081 = vpop.permute.xlu0 %1080
        %1084 = vset.pattern.permute.xlu0 0
        %1085 = vperm.xlu0 %1084, %v427
        %v1086 = vpop.permute.xlu0 %1085
        %1089 = vset.pattern.permute.xlu0 0
        %1090 = vperm.xlu0 %1089, %v428
        %v1091 = vpop.permute.xlu0 %1090
        %1094 = vset.pattern.permute.xlu0 0
        %1095 = vperm.xlu0 %1094, %v429
        %v1096 = vpop.permute.xlu0 %1095
        %1099 = vset.pattern.permute.xlu0 0
        %1100 = vperm.xlu0 %1099, %v430
        %v1101 = vpop.permute.xlu0 %1100
        %1104 = vset.pattern.permute.xlu0 0
        %1105 = vperm.xlu0 %1104, %v431
        %v1106 = vpop.permute.xlu0 %1105
        %1109 = vset.pattern.permute.xlu0 0
        %1110 = vperm.xlu0 %1109, %v432
        %v1111 = vpop.permute.xlu0 %1110
        %1114 = vset.pattern.permute.xlu0 0
        %1115 = vperm.xlu0 %1114, %v433
        %v1116 = vpop.permute.xlu0 %1115
        %1119 = vset.pattern.permute.xlu0 0
        %1120 = vperm.xlu0 %1119, %v434
        %v1121 = vpop.permute.xlu0 %1120
        %1124 = vset.pattern.permute.xlu0 0
        %1125 = vperm.xlu0 %1124, %v435
        %v1126 = vpop.permute.xlu0 %1125
        %1129 = vset.pattern.permute.xlu0 0
        %1130 = vperm.xlu0 %1129, %v436
        %v1131 = vpop.permute.xlu0 %1130
        %1134 = vset.pattern.permute.xlu0 0
        %1135 = vperm.xlu0 %1134, %v437
        %v1136 = vpop.permute.xlu0 %1135
        %1139 = vset.pattern.permute.xlu0 0
        %1140 = vperm.xlu0 %1139, %v438
        %v1141 = vpop.permute.xlu0 %1140
        %1144 = vset.pattern.permute.xlu0 0
        %1145 = vperm.xlu0 %1144, %v439
        %v1146 = vpop.permute.xlu0 %1145
        %1149 = vset.pattern.permute.xlu0 0
        %1150 = vperm.xlu0 %1149, %v440
        %v1151 = vpop.permute.xlu0 %1150
        %1154 = vset.pattern.permute.xlu0 0
        %1155 = vperm.xlu0 %1154, %v441
        %v1156 = vpop.permute.xlu0 %1155
        %1159 = vset.pattern.permute.xlu0 0
        %1160 = vperm.xlu0 %1159, %v442
        %v1161 = vpop.permute.xlu0 %1160
        %1164 = vset.pattern.permute.xlu0 0
        %1165 = vperm.xlu0 %1164, %v443
        %v1166 = vpop.permute.xlu0 %1165
        %1169 = vset.pattern.permute.xlu0 0
        %1170 = vperm.xlu0 %1169, %v444
        %v1171 = vpop.permute.xlu0 %1170
        %1174 = vset.pattern.permute.xlu0 0
        %1175 = vperm.xlu0 %1174, %v445
        %v1176 = vpop.permute.xlu0 %1175
        %1179 = vset.pattern.permute.xlu0 0
        %1180 = vperm.xlu0 %1179, %v446
        %v1181 = vpop.permute.xlu0 %1180
        %1184 = vset.pattern.permute.xlu0 0
        %1185 = vperm.xlu0 %1184, %v447
        %v1186 = vpop.permute.xlu0 %1185
        %1189 = vset.pattern.permute.xlu0 0
        %1190 = vperm.xlu0 %1189, %v448
        %v1191 = vpop.permute.xlu0 %1190
        %1194 = vset.pattern.permute.xlu0 0
        %1195 = vperm.xlu0 %1194, %v449
        %v1196 = vpop.permute.xlu0 %1195
        %1199 = vset.pattern.permute.xlu0 0
        %1200 = vperm.xlu0 %1199, %v450
        %v1201 = vpop.permute.xlu0 %1200
        %1204 = vset.pattern.permute.xlu0 0
        %1205 = vperm.xlu0 %1204, %v451
        %v1206 = vpop.permute.xlu0 %1205
        %1209 = vset.pattern.permute.xlu0 0
        %1210 = vperm.xlu0 %1209, %v452
        %v1211 = vpop.permute.xlu0 %1210
        %1214 = vset.pattern.permute.xlu0 0
        %1215 = vperm.xlu0 %1214, %v453
        %v1216 = vpop.permute.xlu0 %1215
        %1219 = vset.pattern.permute.xlu0 0
        %1220 = vperm.xlu0 %1219, %v454
        %v1221 = vpop.permute.xlu0 %1220
        %v1223 = vmul.f32 %v1066, %v937
        %v1224 = vmul.f32 %v1071, %v940
        %v1225 = vmul.f32 %v1076, %v945
        %v1226 = vmul.f32 %v1081, %v948
        %v1227 = vmul.f32 %v1086, %v953
        %v1228 = vmul.f32 %v1091, %v956
        %v1229 = vmul.f32 %v1096, %v961
        %v1230 = vmul.f32 %v1101, %v964
        %v1231 = vmul.f32 %v1106, %v969
        %v1232 = vmul.f32 %v1111, %v972
        %v1233 = vmul.f32 %v1116, %v977
        %v1234 = vmul.f32 %v1121, %v980
        %v1235 = vmul.f32 %v1126, %v985
        %v1236 = vmul.f32 %v1131, %v988
        %v1237 = vmul.f32 %v1136, %v993
        %v1238 = vmul.f32 %v1141, %v996
        %v1239 = vmul.f32 %v1146, %v1001
        %v1240 = vmul.f32 %v1151, %v1004
        %v1241 = vmul.f32 %v1156, %v1009
        %v1242 = vmul.f32 %v1161, %v1012
        %v1243 = vmul.f32 %v1166, %v1017
        %v1244 = vmul.f32 %v1171, %v1020
        %v1245 = vmul.f32 %v1176, %v1025
        %v1246 = vmul.f32 %v1181, %v1028
        %v1247 = vmul.f32 %v1186, %v1033
        %v1248 = vmul.f32 %v1191, %v1036
        %v1249 = vmul.f32 %v1196, %v1041
        %v1250 = vmul.f32 %v1201, %v1044
        %v1251 = vmul.f32 %v1206, %v1049
        %v1252 = vmul.f32 %v1211, %v1052
        %v1253 = vmul.f32 %v1216, %v1057
        %v1254 = vmul.f32 %v1221, %v1060
        %v1255 = vpack.c.bf16 %v1224, %v1223
        %v1256 = vpack.c.bf16 %v1226, %v1225
        %v1257 = vpack.c.bf16 %v1228, %v1227
        %v1258 = vpack.c.bf16 %v1230, %v1229
        %v1259 = vpack.c.bf16 %v1232, %v1231
        %v1260 = vpack.c.bf16 %v1234, %v1233
        %v1261 = vpack.c.bf16 %v1236, %v1235
        %v1262 = vpack.c.bf16 %v1238, %v1237
        %v1263 = vpack.c.bf16 %v1240, %v1239
        %v1264 = vpack.c.bf16 %v1242, %v1241
        %v1265 = vpack.c.bf16 %v1244, %v1243
        %v1266 = vpack.c.bf16 %v1246, %v1245
        %v1267 = vpack.c.bf16 %v1248, %v1247
        %v1268 = vpack.c.bf16 %v1250, %v1249
        %v1269 = vpack.c.bf16 %v1252, %v1251
        %v1270 = vpack.c.bf16 %v1254, %v1253
        %v1287 = vunpack.c.l.b16 %v1255
        %v1288 = vunpack.c.h.b16 %v1255
        %v1289 = vunpack.c.l.b16 %v1256
        %v1290 = vunpack.c.h.b16 %v1256
        %v1291 = vunpack.c.l.b16 %v1257
        %v1292 = vunpack.c.h.b16 %v1257
        %v1293 = vunpack.c.l.b16 %v1258
        %v1294 = vunpack.c.h.b16 %v1258
        %v1295 = vunpack.c.l.b16 %v1259
        %v1296 = vunpack.c.h.b16 %v1259
        %v1297 = vunpack.c.l.b16 %v1260
        %v1298 = vunpack.c.h.b16 %v1260
        %v1299 = vunpack.c.l.b16 %v1261
        %v1300 = vunpack.c.h.b16 %v1261
        %v1301 = vunpack.c.l.b16 %v1262
        %v1302 = vunpack.c.h.b16 %v1262
        %v1303 = vunpack.c.l.b16 %v1263
        %v1304 = vunpack.c.h.b16 %v1263
        %v1305 = vunpack.c.l.b16 %v1264
        %v1306 = vunpack.c.h.b16 %v1264
        %v1307 = vunpack.c.l.b16 %v1265
        %v1308 = vunpack.c.h.b16 %v1265
        %v1309 = vunpack.c.l.b16 %v1266
        %v1310 = vunpack.c.h.b16 %v1266
        %v1311 = vunpack.c.l.b16 %v1267
        %v1312 = vunpack.c.h.b16 %v1267
        %v1313 = vunpack.c.l.b16 %v1268
        %v1314 = vunpack.c.h.b16 %v1268
        %v1315 = vunpack.c.l.b16 %v1269
        %v1316 = vunpack.c.h.b16 %v1269
        %v1317 = vunpack.c.l.b16 %v1270
        %v1318 = vunpack.c.h.b16 %v1270
        %v1319 = vpack.c.b16 %v1287, %v1287
        %v1320 = vpack.c.b16 %v1288, %v1288
        %v1321 = vpack.c.b16 %v1289, %v1289
        %v1322 = vpack.c.b16 %v1290, %v1290
        %v1323 = vpack.c.b16 %v1291, %v1291
        %v1324 = vpack.c.b16 %v1292, %v1292
        %v1325 = vpack.c.b16 %v1293, %v1293
        %v1326 = vpack.c.b16 %v1294, %v1294
        %v1327 = vpack.c.b16 %v1295, %v1295
        %v1328 = vpack.c.b16 %v1296, %v1296
        %v1329 = vpack.c.b16 %v1297, %v1297
        %v1330 = vpack.c.b16 %v1298, %v1298
        %v1331 = vpack.c.b16 %v1299, %v1299
        %v1332 = vpack.c.b16 %v1300, %v1300
        %v1333 = vpack.c.b16 %v1301, %v1301
        %v1334 = vpack.c.b16 %v1302, %v1302
        %v1335 = vpack.c.b16 %v1303, %v1303
        %v1336 = vpack.c.b16 %v1304, %v1304
        %v1337 = vpack.c.b16 %v1305, %v1305
        %v1338 = vpack.c.b16 %v1306, %v1306
        %v1339 = vpack.c.b16 %v1307, %v1307
        %v1340 = vpack.c.b16 %v1308, %v1308
        %v1341 = vpack.c.b16 %v1309, %v1309
        %v1342 = vpack.c.b16 %v1310, %v1310
        %v1343 = vpack.c.b16 %v1311, %v1311
        %v1344 = vpack.c.b16 %v1312, %v1312
        %v1345 = vpack.c.b16 %v1313, %v1313
        %v1346 = vpack.c.b16 %v1314, %v1314
        %v1347 = vpack.c.b16 %v1315, %v1315
        %v1348 = vpack.c.b16 %v1316, %v1316
        %v1349 = vpack.c.b16 %v1317, %v1317
        %v1350 = vpack.c.b16 %v1318, %v1318
        %1383 = vst [vmem:[%s383] sm:$0xf] %v1319
        %1384 = vst [vmem:[%s383 + $0x4] sm:$0xf] %v1320
        %1385 = vst [vmem:[%s383 + $0x8] sm:$0xf] %v1321
        %1386 = vst [vmem:[%s383 + $0xc] sm:$0xf] %v1322
        %1387 = vst [vmem:[%s383 + $0x10] sm:$0xf] %v1323
        %1388 = vst [vmem:[%s383 + $0x14] sm:$0xf] %v1324
        %1389 = vst [vmem:[%s383 + $0x18] sm:$0xf] %v1325
        %1390 = vst [vmem:[%s383 + $0x1c] sm:$0xf] %v1326
        %1391 = vst [vmem:[%s383 + $0x20] sm:$0xf] %v1327
        %1392 = vst [vmem:[%s383 + $0x24] sm:$0xf] %v1328
        %1393 = vst [vmem:[%s383 + $0x28] sm:$0xf] %v1329
        %1394 = vst [vmem:[%s383 + $0x2c] sm:$0xf] %v1330
        %1395 = vst [vmem:[%s383 + $0x30] sm:$0xf] %v1331
        %1396 = vst [vmem:[%s383 + $0x34] sm:$0xf] %v1332
        %1397 = vst [vmem:[%s383 + $0x38] sm:$0xf] %v1333
        %1398 = vst [vmem:[%s383 + $0x3c] sm:$0xf] %v1334
        %1399 = vst [vmem:[%s383 + $0x40] sm:$0xf] %v1335
        %1400 = vst [vmem:[%s383 + $0x44] sm:$0xf] %v1336
        %1401 = vst [vmem:[%s383 + $0x48] sm:$0xf] %v1337
        %1402 = vst [vmem:[%s383 + $0x4c] sm:$0xf] %v1338
        %1403 = vst [vmem:[%s383 + $0x50] sm:$0xf] %v1339
        %1404 = vst [vmem:[%s383 + $0x54] sm:$0xf] %v1340
        %1405 = vst [vmem:[%s383 + $0x58] sm:$0xf] %v1341
        %1406 = vst [vmem:[%s383 + $0x5c] sm:$0xf] %v1342
        %1407 = vst [vmem:[%s383 + $0x60] sm:$0xf] %v1343
        %1408 = vst [vmem:[%s383 + $0x64] sm:$0xf] %v1344
        %1409 = vst [vmem:[%s383 + $0x68] sm:$0xf] %v1345
        %1410 = vst [vmem:[%s383 + $0x6c] sm:$0xf] %v1346
        %1411 = vst [vmem:[%s383 + $0x70] sm:$0xf] %v1347
        %1412 = vst [vmem:[%s383 + $0x74] sm:$0xf] %v1348
        %1413 = vst [vmem:[%s383 + $0x78] sm:$0xf] %v1349
        %1414 = vst [vmem:[%s383 + $0x7c] sm:$0xf] %v1350
      $region48: #{_lambda_.1} parent=43 // pred_fallthru
        _
      %p1415 = scmp.eq.s32.totalorder %s386, 0
      // Predicated region
      $region49: #{_lambda_.1} parent=43 // pred_check
        %p1416 = pneg %p1415
      $region50: #{_lambda_.1} parent=43 // pred_check_branch
        %1418 = sbr.rel (%p1416) target = $region52
      $region51: #{_lambda_.1} parent=43 // pred_region
        %1419 = vst [vmem:[%s383] sm:$0xf] 0
        %1420 = vst [vmem:[%s383 + $0x4] sm:$0xf] 0
        %1421 = vst [vmem:[%s383 + $0x8] sm:$0xf] 0
        %1422 = vst [vmem:[%s383 + $0xc] sm:$0xf] 0
        %1423 = vst [vmem:[%s383 + $0x10] sm:$0xf] 0
        %1424 = vst [vmem:[%s383 + $0x14] sm:$0xf] 0
        %1425 = vst [vmem:[%s383 + $0x18] sm:$0xf] 0
        %1426 = vst [vmem:[%s383 + $0x1c] sm:$0xf] 0
        %1427 = vst [vmem:[%s383 + $0x20] sm:$0xf] 0
        %1428 = vst [vmem:[%s383 + $0x24] sm:$0xf] 0
        %1429 = vst [vmem:[%s383 + $0x28] sm:$0xf] 0
        %1430 = vst [vmem:[%s383 + $0x2c] sm:$0xf] 0
        %1431 = vst [vmem:[%s383 + $0x30] sm:$0xf] 0
        %1432 = vst [vmem:[%s383 + $0x34] sm:$0xf] 0
        %1433 = vst [vmem:[%s383 + $0x38] sm:$0xf] 0
        %1434 = vst [vmem:[%s383 + $0x3c] sm:$0xf] 0
        %1435 = vst [vmem:[%s383 + $0x40] sm:$0xf] 0
        %1436 = vst [vmem:[%s383 + $0x44] sm:$0xf] 0
        %1437 = vst [vmem:[%s383 + $0x48] sm:$0xf] 0
        %1438 = vst [vmem:[%s383 + $0x4c] sm:$0xf] 0
        %1439 = vst [vmem:[%s383 + $0x50] sm:$0xf] 0
        %1440 = vst [vmem:[%s383 + $0x54] sm:$0xf] 0
        %1441 = vst [vmem:[%s383 + $0x58] sm:$0xf] 0
        %1442 = vst [vmem:[%s383 + $0x5c] sm:$0xf] 0
        %1443 = vst [vmem:[%s383 + $0x60] sm:$0xf] 0
        %1444 = vst [vmem:[%s383 + $0x64] sm:$0xf] 0
        %1445 = vst [vmem:[%s383 + $0x68] sm:$0xf] 0
        %1446 = vst [vmem:[%s383 + $0x6c] sm:$0xf] 0
        %1447 = vst [vmem:[%s383 + $0x70] sm:$0xf] 0
        %1448 = vst [vmem:[%s383 + $0x74] sm:$0xf] 0
        %1449 = vst [vmem:[%s383 + $0x78] sm:$0xf] 0
        %1450 = vst [vmem:[%s383 + $0x7c] sm:$0xf] 0
      $region52: #{_lambda_.1} parent=43 // pred_fallthru
        _
      %s1451 = smul.u32 32, %s29
      %p1452 = scmp.lt.s32.totalorder %s1451, 287
      %s1453 = scalar_select %p1452, %s1451, 287
      %s1454 = smul.addr %s1453, 4
      %s1455 = scalar_lea.vmem %s8, %s1454
      // Predicated region
      $region53: #{_lambda_.1} parent=43 // pred_check
        %p1456 = pneg %p211
      $region54: #{_lambda_.1} parent=43 // pred_check_branch
        %1458 = sbr.rel (%p1456) target = $region56
      $region55: #{_lambda_.1} parent=43 // pred_region
        %s1459 = smul.u32 32, %s29
      $region56: #{_lambda_.1} parent=43 // pred_fallthru
        _
    $region44: #{_lambda_.1} parent=5 // pred_fallthru
      _
    %p1460 = scmp.le.s32.totalorder 2, %s24
    // Predicated region
    $region57: #{_lambda_.1} parent=5 // pred_check
      %p1461 = pneg %p1460
    $region58: #{_lambda_.1} parent=5 // pred_check_branch
      %1463 = sbr.rel (%p1461) target = $region60
    $region59: #{_lambda_.1} parent=5 // pred_region
      %s1464 = ssub.s32 %s24, 2
      // Predicated region
      $region61: #{_lambda_.1} parent=59 // pred_check
        %p1465 = pneg %p217
      $region62: #{_lambda_.1} parent=59 // pred_check_branch
        %1467 = sbr.rel (%p1465) target = $region64
      $region63: #{_lambda_.1} parent=59 // pred_region
        %s1468 = smul.u32 32, %s30
        %p1469 = scmp.lt.s32.totalorder %s1468, 287
        %s1470 = scalar_select %p1469, %s1468, 287
        %s1471 = smul.addr %s1470, 4
        %s1472 = scalar_lea.vmem %s8, %s1471
      $region64: #{_lambda_.1} parent=59 // pred_fallthru
        _
    $region60: #{_lambda_.1} parent=5 // pred_fallthru
      _
  $region6: #{_lambda_.1} parent=0 // loop_footer
    %s28 = sadd.s32 1, %s24
  $region7: #{_lambda_.1} parent=0 // loop_footer_branch
    %23 = sbr.rel target = $region3
  $region8: #{_lambda_.1} parent=0 // loop_exit
    _

</llo_original>
